<compile_context>
chip_gen: v7x
topology: tpu7x:2x2x1
jax: 0.10.0
libtpu: 0.0.40
codegen_flags: <defaults>
</compile_context>

<pallas_src>
import math
import functools

import jax
import jax.numpy as jnp
from jax.experimental import pallas as pl
from jax.experimental.pallas import tpu as pltpu

EPS = 1.1920929e-07  # torch.finfo(torch.float32).eps == F.rms_norm default eps


# ----------------------------- tiling helper -----------------------------

def _tile(dim, target, align):
    """Largest tile <= target that divides `dim` and is `align`-aligned.

    Falls back to the full dim (always legal: block == array extent)."""
    if dim <= target:
        return dim
    t = (min(target, dim) // align) * align
    while t >= align:
        if dim % t == 0:
            return t
        t -= align
    return dim


# ----------------------------- Pallas kernels -----------------------------

def _rms_matmul_kernel(x_ref, w_ref, o_ref, *, inv_k):
    # out = rms_norm(x) @ W   (fused norm + matmul; bf16 MXU, f32 accumulate)
    x = x_ref[...]                                        # (tm, K) f32
    ms = jnp.sum(x * x, axis=-1, keepdims=True) * inv_k
    xn = (x * jax.lax.rsqrt(ms + EPS)).astype(jnp.bfloat16)
    acc = jnp.dot(xn, w_ref[...], preferred_element_type=jnp.float32)
    o_ref[...] = acc.astype(o_ref.dtype)


def _matmul_residual_kernel(y_ref, w_ref, r_ref, o_ref):
    # out = residual + y @ W   (fused residual add; bf16 MXU, f32 accumulate)
    acc = jnp.dot(y_ref[...], w_ref[...], preferred_element_type=jnp.float32)
    o_ref[...] = r_ref[...] + acc


def _rms_mlp_residual_kernel(x_ref, wfc_ref, wproj_ref, o_ref, *, inv_k, chunk):
    # out = x + relu(rms_norm(x) @ W_fc)**2 @ W_proj  (whole MLP + residual)
    # Hidden (4C) contraction is chunked so the f32 relu^2 intermediate stays
    # small (<= (tm, chunk)) instead of spilling a (tm, 4C) slab through VMEM.
    x = x_ref[...]                                        # (tm, C) f32
    ms = jnp.sum(x * x, axis=-1, keepdims=True) * inv_k
    xn = (x * jax.lax.rsqrt(ms + EPS)).astype(jnp.bfloat16)
    acc = x                                               # start from the residual
    hdn = wfc_ref.shape[1]
    for c0 in range(0, hdn, chunk):                       # few static chunks
        h = jnp.dot(xn, wfc_ref[:, c0:c0 + chunk],
                    preferred_element_type=jnp.float32)
        h = jnp.square(jnp.maximum(h, 0.0)).astype(jnp.bfloat16)
        acc = acc + jnp.dot(h, wproj_ref[c0:c0 + chunk, :],
                            preferred_element_type=jnp.float32)
    o_ref[...] = acc


def _attn_kernel(qkv_ref, cos_ref, sin_ref, o_ref, *, n_head, head_dim, n_embd):
    # One batch element per grid step.  qkv_ref: (T, 3C) bf16 slab straight from
    # the QKV projection (q heads | k heads | v heads, head h at cols h*D).
    # Heads are sliced directly from the bf16 ref; only q/k are cast to f32 for
    # rotary + per-head rms_norm, v stays bf16.  Per-head outputs are gathered
    # and written once as a lane-dense (T, C) store.
    # TODO(synk): at real config (D=64 -> head pairs are 128 lanes) move heads
    # into grid=(B, H//2); skipped here because toy D=16 column blocks would
    # violate the 128-lane BlockSpec constraint.
    # TODO(synk): switch to a flash-style K-tiled online-softmax loop before
    # growing block_size past a few hundred tokens ((T,T) f32 scores per head).
    C, D = n_embd, head_dim
    d = D // 2
    T = qkv_ref.shape[0]
    scale = 1.0 / math.sqrt(D)

    cos = cos_ref[...]                                    # (T, D/2) f32
    sin = sin_ref[...]                                    # (T, D/2) f32

    row = jax.lax.broadcasted_iota(jnp.int32, (T, T), 0)
    col = jax.lax.broadcasted_iota(jnp.int32, (T, T), 1)
    causal = col <= row

    def rot_rms(x):
        # PyTorch apply_rotary_emb followed by F.rms_norm over the head dim.
        x1, x2 = x[:, :d], x[:, d:]
        y = jnp.concatenate([x1 * cos + x2 * sin, x2 * cos - x1 * sin], axis=-1)
        ms = jnp.sum(y * y, axis=-1, keepdims=True) * (1.0 / D)
        return y * jax.lax.rsqrt(ms + EPS)

    ys = []
    for h in range(n_head):                               # static head loop
        qh = qkv_ref[:, h * D:(h + 1) * D].astype(jnp.float32)
        kh = qkv_ref[:, C + h * D:C + (h + 1) * D].astype(jnp.float32)
        vh = qkv_ref[:, 2 * C + h * D:2 * C + (h + 1) * D]           # bf16 as-is
        qh = (rot_rms(qh) * scale).astype(jnp.bfloat16)   # fold 1/sqrt(D) into q
        kh = rot_rms(kh).astype(jnp.bfloat16)
        # q @ k^T expressed as a contraction on dim 1 (no materialized transpose).
        s = jax.lax.dot_general(qh, kh, (((1,), (1,)), ((), ())),
                                preferred_element_type=jnp.float32)
        s = jnp.where(causal, s, -1e30)
        s = s - jnp.max(s, axis=-1, keepdims=True)
        p = jnp.exp(s)
        p = p * pl.reciprocal(jnp.sum(p, axis=-1, keepdims=True), approx=True)
        yh = jnp.dot(p.astype(jnp.bfloat16), vh, preferred_element_type=jnp.float32)
        ys.append(yh.astype(o_ref.dtype))
    o_ref[...] = jnp.concatenate(ys, axis=-1)             # single lane-dense store


# ------------------------------ pallas_call wrappers ------------------------------

def rms_matmul(x2d, w, out_dtype):
    """rms_norm(x) @ W, row-tiled; the full output width stays in one tile for
    the small projection/lm_head matmuls so the weight block never changes
    (resident in VMEM) and RMS stats are computed once per row tile."""
    M, K = x2d.shape
    N = w.shape[1]
    tm = _tile(M, 256, 8)
    tn = N if N <= 4096 else _tile(N, 2048, 128)   # only huge vocab gets col-tiled
    kernel = functools.partial(_rms_matmul_kernel, inv_k=1.0 / K)
    return pl.pallas_call(
        kernel,
        out_shape=jax.ShapeDtypeStruct((M, N), out_dtype),
        grid=(M // tm, N // tn),
        in_specs=[pl.BlockSpec((tm, K), lambda i, j: (i, 0)),
                  pl.BlockSpec((K, tn), lambda i, j: (0, j))],
        out_specs=pl.BlockSpec((tm, tn), lambda i, j: (i, j)),
        compiler_params=pltpu.CompilerParams(
            dimension_semantics=("parallel", "parallel")),
    )(x2d, w)


def matmul_residual(y2d, w, res):
    """res + y @ W, row-tiled; full N (=C) in one tile so W stays resident."""
    M, K = y2d.shape
    N = w.shape[1]
    tm = _tile(M, 256, 8)
    # TODO(synk): on v7x at GPT-2 scale, single-buffer the grid-invariant weight
    # block (pipeline_mode=pl.Buffered(1)) to save dead VMEM.
    return pl.pallas_call(
        _matmul_residual_kernel,
        out_shape=jax.ShapeDtypeStruct((M, N), jnp.float32),
        grid=(M // tm,),
        in_specs=[pl.BlockSpec((tm, K), lambda i: (i, 0)),
                  pl.BlockSpec((K, N), lambda i: (0, 0)),
                  pl.BlockSpec((tm, N), lambda i: (i, 0))],
        out_specs=pl.BlockSpec((tm, N), lambda i: (i, 0)),
        compiler_params=pltpu.CompilerParams(dimension_semantics=("parallel",)),
    )(y2d, w, res)


def rms_mlp_residual(x2d, w_fc, w_proj):
    """x + c_proj(relu(c_fc(rms_norm(x)))**2), row-tiled, hidden dim chunked."""
    M, C = x2d.shape
    Hdn = w_fc.shape[1]
    tm = _tile(M, 256, 8)
    chunk = _tile(Hdn, 512, 128)
    kernel = functools.partial(_rms_mlp_residual_kernel, inv_k=1.0 / C, chunk=chunk)
    return pl.pallas_call(
        kernel,
        out_shape=jax.ShapeDtypeStruct((M, C), jnp.float32),
        grid=(M // tm,),
        in_specs=[pl.BlockSpec((tm, C), lambda i: (i, 0)),
                  pl.BlockSpec((C, Hdn), lambda i: (0, 0)),
                  pl.BlockSpec((Hdn, C), lambda i: (0, 0))],
        out_specs=pl.BlockSpec((tm, C), lambda i: (i, 0)),
        compiler_params=pltpu.CompilerParams(dimension_semantics=("parallel",)),
    )(x2d, w_fc, w_proj)


def attention(qkv, cos, sin, *, batch, seq, n_head, head_dim):
    """Rotary + per-head rms_norm + causal SDPA on the (B*T, 3C) bf16 qkv slab."""
    BT, C3 = qkv.shape
    C = C3 // 3
    d = head_dim // 2
    kernel = functools.partial(_attn_kernel, n_head=n_head,
                               head_dim=head_dim, n_embd=C)
    return pl.pallas_call(
        kernel,
        out_shape=jax.ShapeDtypeStruct((BT, C), jnp.bfloat16),
        grid=(batch,),
        in_specs=[pl.BlockSpec((seq, C3), lambda b: (b, 0)),
                  pl.BlockSpec((seq, d), lambda b: (0, 0)),
                  pl.BlockSpec((seq, d), lambda b: (0, 0))],
        out_specs=pl.BlockSpec((seq, C), lambda b: (b, 0)),
        compiler_params=pltpu.CompilerParams(dimension_semantics=("parallel",)),
    )(qkv, cos, sin)


# ------------------------------ model glue ------------------------------

def rotary_tables(T, dim, base=10000.0):
    # Rotary.forward caches cos/sin of outer(t, inv_freq), shape (T, dim/2).
    inv_freq = 1.0 / (base ** (jnp.arange(0, dim, 2, dtype=jnp.float32) / dim))
    t = jnp.arange(T, dtype=jnp.float32)
    freqs = jnp.outer(t, inv_freq)
    return jnp.cos(freqs), jnp.sin(freqs)


def init_params(key, *, vocab_size, block_size, n_layer, n_head, n_embd):
    del block_size  # wpe exists in the module but is unused in forward
    std = 0.02
    proj_std = 0.02 / math.sqrt(2 * n_layer)   # GPT re-inits *.c_proj.weight with this std
    keys = jax.random.split(key, 2 + 4 * n_layer)
    params = {
        "wte": std * jax.random.normal(keys[0], (vocab_size, n_embd), jnp.float32),
        # NOTE: PyTorch __init__ zeroes lm_head.weight; use a small normal init
        # here so the synthetic output is non-degenerate.
        "lm_head": (std * jax.random.normal(keys[1], (n_embd, vocab_size),
                                            jnp.float32)).astype(jnp.bfloat16),
        "blocks": [],
    }
    for l in range(n_layer):
        k0, k1, k2, k3 = keys[2 + 4 * l: 6 + 4 * l]
        params["blocks"].append({
            "w_attn": (std * jax.random.normal(k0, (n_embd, 3 * n_embd),
                                               jnp.float32)).astype(jnp.bfloat16),
            "w_attn_proj": (proj_std * jax.random.normal(k1, (n_embd, n_embd),
                                                         jnp.float32)).astype(jnp.bfloat16),
            "w_fc": (std * jax.random.normal(k2, (n_embd, 4 * n_embd),
                                             jnp.float32)).astype(jnp.bfloat16),
            "w_mlp_proj": (proj_std * jax.random.normal(k3, (4 * n_embd, n_embd),
                                                        jnp.float32)).astype(jnp.bfloat16),
        })
    return params


def gpt_forward(params, idx, *, n_head):
    B, T = idx.shape
    C = params["wte"].shape[1]
    H = n_head
    D = C // H

    # Embedding gather + post-embedding F.rms_norm stay in XLA (memory-bound,
    # fused into the gather; no HBM round-trip for a standalone norm kernel).
    x = jnp.take(params["wte"], idx.reshape(-1), axis=0).astype(jnp.float32)
    x = x * jax.lax.rsqrt(jnp.mean(x * x, axis=-1, keepdims=True) + EPS)

    cos, sin = rotary_tables(T, D)                        # (T, D/2) each

    for blk in params["blocks"]:
        # --- attention sublayer: x = x + c_proj(attn(rms_norm(x))) ---
        qkv = rms_matmul(x, blk["w_attn"], out_dtype=jnp.bfloat16)   # (B*T, 3C) bf16
        y = attention(qkv, cos, sin, batch=B, seq=T,
                      n_head=H, head_dim=D)                          # (B*T, C) bf16
        x = matmul_residual(y, blk["w_attn_proj"], x)                # f32 residual

        # --- MLP sublayer: x = x + c_proj(relu(c_fc(rms_norm(x)))**2) ---
        x = rms_mlp_residual(x, blk["w_fc"], blk["w_mlp_proj"])      # f32 residual

    # targets=None path: final rms_norm is row-wise, so apply it fused into the
    # lm_head matmul on the last-token rows only.
    x_last = x.reshape(B, T, C)[:, -1, :]                 # (B, C)
    logits = rms_matmul(x_last, params["lm_head"], out_dtype=jnp.float32)
    return logits.reshape(B, 1, -1)                       # == lm_head(rms_norm(x)[:, [-1], :])
    # TODO(synk): cross-entropy loss path (targets != None) not implemented.


if __name__ == "__main__":
    # Small shapes consistent with the module (scaled down from 256/384/6/6).
    B, T = 2, 8
    vocab_size = 96
    block_size = 16
    n_layer, n_head, n_embd = 2, 4, 64

    key = jax.random.PRNGKey(0)
    pkey, ikey = jax.random.split(key)
    params = init_params(pkey, vocab_size=vocab_size, block_size=block_size,
                         n_layer=n_layer, n_head=n_head, n_embd=n_embd)
    idx = jax.random.randint(ikey, (B, T), 0, vocab_size, dtype=jnp.int32)

    fwd = jax.jit(functools.partial(gpt_forward, n_head=n_head))
    logits = jax.block_until_ready(fwd(params, idx))

    assert logits.shape == (B, 1, vocab_size), logits.shape
    assert bool(jnp.all(jnp.isfinite(logits)))
    print("KERNEL_OK")
</pallas_src>

<mosaic_0001>
module attributes {stable_mosaic.version = 11 : i64} {
  func.func @_attn_kernel(%arg0: i32, %arg1: memref<8x192xbf16, #tpu.memory_space<vmem>>, %arg2: memref<8x8xf32, #tpu.memory_space<vmem>>, %arg3: memref<8x8xf32, #tpu.memory_space<vmem>>, %arg4: memref<8x64xbf16, #tpu.memory_space<vmem>>) attributes {dimension_semantics = [#tpu.dimension_semantics<parallel>], iteration_bounds = array<i64: 2>, scalar_prefetch = 0 : i64, scratch_operands = 0 : i64, tpu.core_type = #tpu.core_type<tc>, window_params = [{transform_indices = @transform_0, window_bounds = array<i64: 8, 192>}, {pipeline_mode = #tpu.pipeline_mode<synchronous>, transform_indices = @transform_1, window_bounds = array<i64: 8, 8>}, {pipeline_mode = #tpu.pipeline_mode<synchronous>, transform_indices = @transform_2, window_bounds = array<i64: 8, 8>}, {transform_indices = @transform_3, window_bounds = array<i64: 8, 64>}]} {
    %c0 = arith.constant 0 : index
    %c0_0 = arith.constant 0 : index
    %0 = vector.load %arg2[%c0, %c0_0] : memref<8x8xf32, #tpu.memory_space<vmem>>, vector<8x8xf32>
    %c0_1 = arith.constant 0 : index
    %c0_2 = arith.constant 0 : index
    %1 = vector.load %arg3[%c0_1, %c0_2] : memref<8x8xf32, #tpu.memory_space<vmem>>, vector<8x8xf32>
    %2 = tpu.iota {dimensions = array<i32: 0>} : vector<8x8xi32>
    %3 = tpu.iota {dimensions = array<i32: 1>} : vector<8x8xi32>
    %4 = arith.cmpi sle, %3, %2 : vector<8x8xi32>
    %c0_3 = arith.constant 0 : index
    %c0_4 = arith.constant 0 : index
    %5 = vector.load %arg1[%c0_3, %c0_4] : memref<8x192xbf16, #tpu.memory_space<vmem>>, vector<8x16xbf16>
    %6 = arith.extf %5 : vector<8x16xbf16> to vector<8x16xf32>
    %c0_5 = arith.constant 0 : index
    %c64 = arith.constant 64 : index
    %7 = vector.load %arg1[%c0_5, %c64] : memref<8x192xbf16, #tpu.memory_space<vmem>>, vector<8x16xbf16>
    %8 = arith.extf %7 : vector<8x16xbf16> to vector<8x16xf32>
    %c0_6 = arith.constant 0 : index
    %c128 = arith.constant 128 : index
    %9 = vector.load %arg1[%c0_6, %c128] : memref<8x192xbf16, #tpu.memory_space<vmem>>, vector<8x16xbf16>
    %10 = vector.extract_strided_slice %6 {offsets = [0, 0], sizes = [8, 8], strides = [1, 1]} : vector<8x16xf32> to vector<8x8xf32>
    %11 = vector.extract_strided_slice %6 {offsets = [0, 8], sizes = [8, 8], strides = [1, 1]} : vector<8x16xf32> to vector<8x8xf32>
    %12 = arith.mulf %10, %0 : vector<8x8xf32>
    %13 = arith.mulf %11, %1 : vector<8x8xf32>
    %14 = arith.addf %12, %13 : vector<8x8xf32>
    %15 = arith.mulf %11, %0 : vector<8x8xf32>
    %16 = arith.mulf %10, %1 : vector<8x8xf32>
    %17 = arith.subf %15, %16 : vector<8x8xf32>
    %18 = tpu.concatenate %14, %17 in 1 : vector<8x8xf32>, vector<8x8xf32> -> vector<8x16xf32>
    %19 = arith.mulf %18, %18 : vector<8x16xf32>
    %cst = arith.constant dense<0.000000e+00> : vector<8xf32>
    %20 = vector.multi_reduction <add>, %19, %cst [1] : vector<8x16xf32> to vector<8xf32>
    %21 = vector.shape_cast %20 : vector<8xf32> to vector<8x1xf32>
    %cst_7 = arith.constant 6.250000e-02 : f32
    %22 = vector.broadcast %cst_7 : f32 to vector<8x1xf32>
    %23 = arith.mulf %21, %22 : vector<8x1xf32>
    %cst_8 = arith.constant 1.1920929E-7 : f32
    %24 = vector.broadcast %cst_8 : f32 to vector<8x1xf32>
    %25 = arith.addf %23, %24 : vector<8x1xf32>
    %26 = math.rsqrt %25 : vector<8x1xf32>
    %27 = vector.broadcast %26 : vector<8x1xf32> to vector<8x16xf32>
    %28 = arith.mulf %18, %27 : vector<8x16xf32>
    %cst_9 = arith.constant 2.500000e-01 : f32
    %29 = vector.broadcast %cst_9 : f32 to vector<8x16xf32>
    %30 = arith.mulf %28, %29 : vector<8x16xf32>
    %31 = arith.truncf %30 : vector<8x16xf32> to vector<8x16xbf16>
    %32 = vector.extract_strided_slice %8 {offsets = [0, 0], sizes = [8, 8], strides = [1, 1]} : vector<8x16xf32> to vector<8x8xf32>
    %33 = vector.extract_strided_slice %8 {offsets = [0, 8], sizes = [8, 8], strides = [1, 1]} : vector<8x16xf32> to vector<8x8xf32>
    %34 = arith.mulf %32, %0 : vector<8x8xf32>
    %35 = arith.mulf %33, %1 : vector<8x8xf32>
    %36 = arith.addf %34, %35 : vector<8x8xf32>
    %37 = arith.mulf %33, %0 : vector<8x8xf32>
    %38 = arith.mulf %32, %1 : vector<8x8xf32>
    %39 = arith.subf %37, %38 : vector<8x8xf32>
    %40 = tpu.concatenate %36, %39 in 1 : vector<8x8xf32>, vector<8x8xf32> -> vector<8x16xf32>
    %41 = arith.mulf %40, %40 : vector<8x16xf32>
    %cst_10 = arith.constant dense<0.000000e+00> : vector<8xf32>
    %42 = vector.multi_reduction <add>, %41, %cst_10 [1] : vector<8x16xf32> to vector<8xf32>
    %43 = vector.shape_cast %42 : vector<8xf32> to vector<8x1xf32>
    %cst_11 = arith.constant 6.250000e-02 : f32
    %44 = vector.broadcast %cst_11 : f32 to vector<8x1xf32>
    %45 = arith.mulf %43, %44 : vector<8x1xf32>
    %cst_12 = arith.constant 1.1920929E-7 : f32
    %46 = vector.broadcast %cst_12 : f32 to vector<8x1xf32>
    %47 = arith.addf %45, %46 : vector<8x1xf32>
    %48 = math.rsqrt %47 : vector<8x1xf32>
    %49 = vector.broadcast %48 : vector<8x1xf32> to vector<8x16xf32>
    %50 = arith.mulf %40, %49 : vector<8x16xf32>
    %51 = arith.truncf %50 : vector<8x16xf32> to vector<8x16xbf16>
    %cst_13 = arith.constant dense<0.000000e+00> : vector<8x8xf32>
    %52 = tpu.matmul %31, %51, %cst_13 {dimension_numbers = #tpu.dot_dimension_numbers<[1], [1], [0], [0], [0, 0, 1, 0], [], []>} : vector<8x16xbf16>, vector<8x16xbf16>, vector<8x8xf32> -> vector<8x8xf32>
    %cst_14 = arith.constant -1.000000e+30 : f32
    %53 = vector.broadcast %cst_14 : f32 to vector<8x8xf32>
    %54 = arith.select %4, %52, %53 : vector<8x8xi1>, vector<8x8xf32>
    %cst_15 = arith.constant dense<0xFF800000> : vector<8xf32>
    %55 = vector.multi_reduction <maximumf>, %54, %cst_15 [1] : vector<8x8xf32> to vector<8xf32>
    %56 = vector.shape_cast %55 : vector<8xf32> to vector<8x1xf32>
    %57 = vector.broadcast %56 : vector<8x1xf32> to vector<8x8xf32>
    %58 = arith.subf %54, %57 : vector<8x8xf32>
    %59 = math.exp %58 : vector<8x8xf32>
    %cst_16 = arith.constant dense<0.000000e+00> : vector<8xf32>
    %60 = vector.multi_reduction <add>, %59, %cst_16 [1] : vector<8x8xf32> to vector<8xf32>
    %61 = vector.shape_cast %60 : vector<8xf32> to vector<8x1xf32>
    %62 = tpu.reciprocal %61 {approx = true} : vector<8x1xf32> -> vector<8x1xf32>
    %63 = vector.broadcast %62 : vector<8x1xf32> to vector<8x8xf32>
    %64 = arith.mulf %59, %63 : vector<8x8xf32>
    %65 = arith.truncf %64 : vector<8x8xf32> to vector<8x8xbf16>
    %cst_17 = arith.constant dense<0.000000e+00> : vector<8x16xf32>
    %66 = tpu.matmul %65, %9, %cst_17 {dimension_numbers = #tpu.dot_dimension_numbers<[1], [0], [0], [1], [0, 0, 1, 1], [], []>} : vector<8x8xbf16>, vector<8x16xbf16>, vector<8x16xf32> -> vector<8x16xf32>
    %67 = arith.truncf %66 : vector<8x16xf32> to vector<8x16xbf16>
    %c0_18 = arith.constant 0 : index
    %c16 = arith.constant 16 : index
    %68 = vector.load %arg1[%c0_18, %c16] : memref<8x192xbf16, #tpu.memory_space<vmem>>, vector<8x16xbf16>
    %69 = arith.extf %68 : vector<8x16xbf16> to vector<8x16xf32>
    %c0_19 = arith.constant 0 : index
    %c80 = arith.constant 80 : index
    %70 = vector.load %arg1[%c0_19, %c80] : memref<8x192xbf16, #tpu.memory_space<vmem>>, vector<8x16xbf16>
    %71 = arith.extf %70 : vector<8x16xbf16> to vector<8x16xf32>
    %c0_20 = arith.constant 0 : index
    %c144 = arith.constant 144 : index
    %72 = vector.load %arg1[%c0_20, %c144] : memref<8x192xbf16, #tpu.memory_space<vmem>>, vector<8x16xbf16>
    %73 = vector.extract_strided_slice %69 {offsets = [0, 0], sizes = [8, 8], strides = [1, 1]} : vector<8x16xf32> to vector<8x8xf32>
    %74 = vector.extract_strided_slice %69 {offsets = [0, 8], sizes = [8, 8], strides = [1, 1]} : vector<8x16xf32> to vector<8x8xf32>
    %75 = arith.mulf %73, %0 : vector<8x8xf32>
    %76 = arith.mulf %74, %1 : vector<8x8xf32>
    %77 = arith.addf %75, %76 : vector<8x8xf32>
    %78 = arith.mulf %74, %0 : vector<8x8xf32>
    %79 = arith.mulf %73, %1 : vector<8x8xf32>
    %80 = arith.subf %78, %79 : vector<8x8xf32>
    %81 = tpu.concatenate %77, %80 in 1 : vector<8x8xf32>, vector<8x8xf32> -> vector<8x16xf32>
    %82 = arith.mulf %81, %81 : vector<8x16xf32>
    %cst_21 = arith.constant dense<0.000000e+00> : vector<8xf32>
    %83 = vector.multi_reduction <add>, %82, %cst_21 [1] : vector<8x16xf32> to vector<8xf32>
    %84 = vector.shape_cast %83 : vector<8xf32> to vector<8x1xf32>
    %cst_22 = arith.constant 6.250000e-02 : f32
    %85 = vector.broadcast %cst_22 : f32 to vector<8x1xf32>
    %86 = arith.mulf %84, %85 : vector<8x1xf32>
    %cst_23 = arith.constant 1.1920929E-7 : f32
    %87 = vector.broadcast %cst_23 : f32 to vector<8x1xf32>
    %88 = arith.addf %86, %87 : vector<8x1xf32>
    %89 = math.rsqrt %88 : vector<8x1xf32>
    %90 = vector.broadcast %89 : vector<8x1xf32> to vector<8x16xf32>
    %91 = arith.mulf %81, %90 : vector<8x16xf32>
    %cst_24 = arith.constant 2.500000e-01 : f32
    %92 = vector.broadcast %cst_24 : f32 to vector<8x16xf32>
    %93 = arith.mulf %91, %92 : vector<8x16xf32>
    %94 = arith.truncf %93 : vector<8x16xf32> to vector<8x16xbf16>
    %95 = vector.extract_strided_slice %71 {offsets = [0, 0], sizes = [8, 8], strides = [1, 1]} : vector<8x16xf32> to vector<8x8xf32>
    %96 = vector.extract_strided_slice %71 {offsets = [0, 8], sizes = [8, 8], strides = [1, 1]} : vector<8x16xf32> to vector<8x8xf32>
    %97 = arith.mulf %95, %0 : vector<8x8xf32>
    %98 = arith.mulf %96, %1 : vector<8x8xf32>
    %99 = arith.addf %97, %98 : vector<8x8xf32>
    %100 = arith.mulf %96, %0 : vector<8x8xf32>
    %101 = arith.mulf %95, %1 : vector<8x8xf32>
    %102 = arith.subf %100, %101 : vector<8x8xf32>
    %103 = tpu.concatenate %99, %102 in 1 : vector<8x8xf32>, vector<8x8xf32> -> vector<8x16xf32>
    %104 = arith.mulf %103, %103 : vector<8x16xf32>
    %cst_25 = arith.constant dense<0.000000e+00> : vector<8xf32>
    %105 = vector.multi_reduction <add>, %104, %cst_25 [1] : vector<8x16xf32> to vector<8xf32>
    %106 = vector.shape_cast %105 : vector<8xf32> to vector<8x1xf32>
    %cst_26 = arith.constant 6.250000e-02 : f32
    %107 = vector.broadcast %cst_26 : f32 to vector<8x1xf32>
    %108 = arith.mulf %106, %107 : vector<8x1xf32>
    %cst_27 = arith.constant 1.1920929E-7 : f32
    %109 = vector.broadcast %cst_27 : f32 to vector<8x1xf32>
    %110 = arith.addf %108, %109 : vector<8x1xf32>
    %111 = math.rsqrt %110 : vector<8x1xf32>
    %112 = vector.broadcast %111 : vector<8x1xf32> to vector<8x16xf32>
    %113 = arith.mulf %103, %112 : vector<8x16xf32>
    %114 = arith.truncf %113 : vector<8x16xf32> to vector<8x16xbf16>
    %cst_28 = arith.constant dense<0.000000e+00> : vector<8x8xf32>
    %115 = tpu.matmul %94, %114, %cst_28 {dimension_numbers = #tpu.dot_dimension_numbers<[1], [1], [0], [0], [0, 0, 1, 0], [], []>} : vector<8x16xbf16>, vector<8x16xbf16>, vector<8x8xf32> -> vector<8x8xf32>
    %cst_29 = arith.constant -1.000000e+30 : f32
    %116 = vector.broadcast %cst_29 : f32 to vector<8x8xf32>
    %117 = arith.select %4, %115, %116 : vector<8x8xi1>, vector<8x8xf32>
    %cst_30 = arith.constant dense<0xFF800000> : vector<8xf32>
    %118 = vector.multi_reduction <maximumf>, %117, %cst_30 [1] : vector<8x8xf32> to vector<8xf32>
    %119 = vector.shape_cast %118 : vector<8xf32> to vector<8x1xf32>
    %120 = vector.broadcast %119 : vector<8x1xf32> to vector<8x8xf32>
    %121 = arith.subf %117, %120 : vector<8x8xf32>
    %122 = math.exp %121 : vector<8x8xf32>
    %cst_31 = arith.constant dense<0.000000e+00> : vector<8xf32>
    %123 = vector.multi_reduction <add>, %122, %cst_31 [1] : vector<8x8xf32> to vector<8xf32>
    %124 = vector.shape_cast %123 : vector<8xf32> to vector<8x1xf32>
    %125 = tpu.reciprocal %124 {approx = true} : vector<8x1xf32> -> vector<8x1xf32>
    %126 = vector.broadcast %125 : vector<8x1xf32> to vector<8x8xf32>
    %127 = arith.mulf %122, %126 : vector<8x8xf32>
    %128 = arith.truncf %127 : vector<8x8xf32> to vector<8x8xbf16>
    %cst_32 = arith.constant dense<0.000000e+00> : vector<8x16xf32>
    %129 = tpu.matmul %128, %72, %cst_32 {dimension_numbers = #tpu.dot_dimension_numbers<[1], [0], [0], [1], [0, 0, 1, 1], [], []>} : vector<8x8xbf16>, vector<8x16xbf16>, vector<8x16xf32> -> vector<8x16xf32>
    %130 = arith.truncf %129 : vector<8x16xf32> to vector<8x16xbf16>
    %c0_33 = arith.constant 0 : index
    %c32 = arith.constant 32 : index
    %131 = vector.load %arg1[%c0_33, %c32] : memref<8x192xbf16, #tpu.memory_space<vmem>>, vector<8x16xbf16>
    %132 = arith.extf %131 : vector<8x16xbf16> to vector<8x16xf32>
    %c0_34 = arith.constant 0 : index
    %c96 = arith.constant 96 : index
    %133 = vector.load %arg1[%c0_34, %c96] : memref<8x192xbf16, #tpu.memory_space<vmem>>, vector<8x16xbf16>
    %134 = arith.extf %133 : vector<8x16xbf16> to vector<8x16xf32>
    %c0_35 = arith.constant 0 : index
    %c160 = arith.constant 160 : index
    %135 = vector.load %arg1[%c0_35, %c160] : memref<8x192xbf16, #tpu.memory_space<vmem>>, vector<8x16xbf16>
    %136 = vector.extract_strided_slice %132 {offsets = [0, 0], sizes = [8, 8], strides = [1, 1]} : vector<8x16xf32> to vector<8x8xf32>
    %137 = vector.extract_strided_slice %132 {offsets = [0, 8], sizes = [8, 8], strides = [1, 1]} : vector<8x16xf32> to vector<8x8xf32>
    %138 = arith.mulf %136, %0 : vector<8x8xf32>
    %139 = arith.mulf %137, %1 : vector<8x8xf32>
    %140 = arith.addf %138, %139 : vector<8x8xf32>
    %141 = arith.mulf %137, %0 : vector<8x8xf32>
    %142 = arith.mulf %136, %1 : vector<8x8xf32>
    %143 = arith.subf %141, %142 : vector<8x8xf32>
    %144 = tpu.concatenate %140, %143 in 1 : vector<8x8xf32>, vector<8x8xf32> -> vector<8x16xf32>
    %145 = arith.mulf %144, %144 : vector<8x16xf32>
    %cst_36 = arith.constant dense<0.000000e+00> : vector<8xf32>
    %146 = vector.multi_reduction <add>, %145, %cst_36 [1] : vector<8x16xf32> to vector<8xf32>
    %147 = vector.shape_cast %146 : vector<8xf32> to vector<8x1xf32>
    %cst_37 = arith.constant 6.250000e-02 : f32
    %148 = vector.broadcast %cst_37 : f32 to vector<8x1xf32>
    %149 = arith.mulf %147, %148 : vector<8x1xf32>
    %cst_38 = arith.constant 1.1920929E-7 : f32
    %150 = vector.broadcast %cst_38 : f32 to vector<8x1xf32>
    %151 = arith.addf %149, %150 : vector<8x1xf32>
    %152 = math.rsqrt %151 : vector<8x1xf32>
    %153 = vector.broadcast %152 : vector<8x1xf32> to vector<8x16xf32>
    %154 = arith.mulf %144, %153 : vector<8x16xf32>
    %cst_39 = arith.constant 2.500000e-01 : f32
    %155 = vector.broadcast %cst_39 : f32 to vector<8x16xf32>
    %156 = arith.mulf %154, %155 : vector<8x16xf32>
    %157 = arith.truncf %156 : vector<8x16xf32> to vector<8x16xbf16>
    %158 = vector.extract_strided_slice %134 {offsets = [0, 0], sizes = [8, 8], strides = [1, 1]} : vector<8x16xf32> to vector<8x8xf32>
    %159 = vector.extract_strided_slice %134 {offsets = [0, 8], sizes = [8, 8], strides = [1, 1]} : vector<8x16xf32> to vector<8x8xf32>
    %160 = arith.mulf %158, %0 : vector<8x8xf32>
    %161 = arith.mulf %159, %1 : vector<8x8xf32>
    %162 = arith.addf %160, %161 : vector<8x8xf32>
    %163 = arith.mulf %159, %0 : vector<8x8xf32>
    %164 = arith.mulf %158, %1 : vector<8x8xf32>
    %165 = arith.subf %163, %164 : vector<8x8xf32>
    %166 = tpu.concatenate %162, %165 in 1 : vector<8x8xf32>, vector<8x8xf32> -> vector<8x16xf32>
    %167 = arith.mulf %166, %166 : vector<8x16xf32>
    %cst_40 = arith.constant dense<0.000000e+00> : vector<8xf32>
    %168 = vector.multi_reduction <add>, %167, %cst_40 [1] : vector<8x16xf32> to vector<8xf32>
    %169 = vector.shape_cast %168 : vector<8xf32> to vector<8x1xf32>
    %cst_41 = arith.constant 6.250000e-02 : f32
    %170 = vector.broadcast %cst_41 : f32 to vector<8x1xf32>
    %171 = arith.mulf %169, %170 : vector<8x1xf32>
    %cst_42 = arith.constant 1.1920929E-7 : f32
    %172 = vector.broadcast %cst_42 : f32 to vector<8x1xf32>
    %173 = arith.addf %171, %172 : vector<8x1xf32>
    %174 = math.rsqrt %173 : vector<8x1xf32>
    %175 = vector.broadcast %174 : vector<8x1xf32> to vector<8x16xf32>
    %176 = arith.mulf %166, %175 : vector<8x16xf32>
    %177 = arith.truncf %176 : vector<8x16xf32> to vector<8x16xbf16>
    %cst_43 = arith.constant dense<0.000000e+00> : vector<8x8xf32>
    %178 = tpu.matmul %157, %177, %cst_43 {dimension_numbers = #tpu.dot_dimension_numbers<[1], [1], [0], [0], [0, 0, 1, 0], [], []>} : vector<8x16xbf16>, vector<8x16xbf16>, vector<8x8xf32> -> vector<8x8xf32>
    %cst_44 = arith.constant -1.000000e+30 : f32
    %179 = vector.broadcast %cst_44 : f32 to vector<8x8xf32>
    %180 = arith.select %4, %178, %179 : vector<8x8xi1>, vector<8x8xf32>
    %cst_45 = arith.constant dense<0xFF800000> : vector<8xf32>
    %181 = vector.multi_reduction <maximumf>, %180, %cst_45 [1] : vector<8x8xf32> to vector<8xf32>
    %182 = vector.shape_cast %181 : vector<8xf32> to vector<8x1xf32>
    %183 = vector.broadcast %182 : vector<8x1xf32> to vector<8x8xf32>
    %184 = arith.subf %180, %183 : vector<8x8xf32>
    %185 = math.exp %184 : vector<8x8xf32>
    %cst_46 = arith.constant dense<0.000000e+00> : vector<8xf32>
    %186 = vector.multi_reduction <add>, %185, %cst_46 [1] : vector<8x8xf32> to vector<8xf32>
    %187 = vector.shape_cast %186 : vector<8xf32> to vector<8x1xf32>
    %188 = tpu.reciprocal %187 {approx = true} : vector<8x1xf32> -> vector<8x1xf32>
    %189 = vector.broadcast %188 : vector<8x1xf32> to vector<8x8xf32>
    %190 = arith.mulf %185, %189 : vector<8x8xf32>
    %191 = arith.truncf %190 : vector<8x8xf32> to vector<8x8xbf16>
    %cst_47 = arith.constant dense<0.000000e+00> : vector<8x16xf32>
    %192 = tpu.matmul %191, %135, %cst_47 {dimension_numbers = #tpu.dot_dimension_numbers<[1], [0], [0], [1], [0, 0, 1, 1], [], []>} : vector<8x8xbf16>, vector<8x16xbf16>, vector<8x16xf32> -> vector<8x16xf32>
    %193 = arith.truncf %192 : vector<8x16xf32> to vector<8x16xbf16>
    %c0_48 = arith.constant 0 : index
    %c48 = arith.constant 48 : index
    %194 = vector.load %arg1[%c0_48, %c48] : memref<8x192xbf16, #tpu.memory_space<vmem>>, vector<8x16xbf16>
    %195 = arith.extf %194 : vector<8x16xbf16> to vector<8x16xf32>
    %c0_49 = arith.constant 0 : index
    %c112 = arith.constant 112 : index
    %196 = vector.load %arg1[%c0_49, %c112] : memref<8x192xbf16, #tpu.memory_space<vmem>>, vector<8x16xbf16>
    %197 = arith.extf %196 : vector<8x16xbf16> to vector<8x16xf32>
    %c0_50 = arith.constant 0 : index
    %c176 = arith.constant 176 : index
    %198 = vector.load %arg1[%c0_50, %c176] : memref<8x192xbf16, #tpu.memory_space<vmem>>, vector<8x16xbf16>
    %199 = vector.extract_strided_slice %195 {offsets = [0, 0], sizes = [8, 8], strides = [1, 1]} : vector<8x16xf32> to vector<8x8xf32>
    %200 = vector.extract_strided_slice %195 {offsets = [0, 8], sizes = [8, 8], strides = [1, 1]} : vector<8x16xf32> to vector<8x8xf32>
    %201 = arith.mulf %199, %0 : vector<8x8xf32>
    %202 = arith.mulf %200, %1 : vector<8x8xf32>
    %203 = arith.addf %201, %202 : vector<8x8xf32>
    %204 = arith.mulf %200, %0 : vector<8x8xf32>
    %205 = arith.mulf %199, %1 : vector<8x8xf32>
    %206 = arith.subf %204, %205 : vector<8x8xf32>
    %207 = tpu.concatenate %203, %206 in 1 : vector<8x8xf32>, vector<8x8xf32> -> vector<8x16xf32>
    %208 = arith.mulf %207, %207 : vector<8x16xf32>
    %cst_51 = arith.constant dense<0.000000e+00> : vector<8xf32>
    %209 = vector.multi_reduction <add>, %208, %cst_51 [1] : vector<8x16xf32> to vector<8xf32>
    %210 = vector.shape_cast %209 : vector<8xf32> to vector<8x1xf32>
    %cst_52 = arith.constant 6.250000e-02 : f32
    %211 = vector.broadcast %cst_52 : f32 to vector<8x1xf32>
    %212 = arith.mulf %210, %211 : vector<8x1xf32>
    %cst_53 = arith.constant 1.1920929E-7 : f32
    %213 = vector.broadcast %cst_53 : f32 to vector<8x1xf32>
    %214 = arith.addf %212, %213 : vector<8x1xf32>
    %215 = math.rsqrt %214 : vector<8x1xf32>
    %216 = vector.broadcast %215 : vector<8x1xf32> to vector<8x16xf32>
    %217 = arith.mulf %207, %216 : vector<8x16xf32>
    %cst_54 = arith.constant 2.500000e-01 : f32
    %218 = vector.broadcast %cst_54 : f32 to vector<8x16xf32>
    %219 = arith.mulf %217, %218 : vector<8x16xf32>
    %220 = arith.truncf %219 : vector<8x16xf32> to vector<8x16xbf16>
    %221 = vector.extract_strided_slice %197 {offsets = [0, 0], sizes = [8, 8], strides = [1, 1]} : vector<8x16xf32> to vector<8x8xf32>
    %222 = vector.extract_strided_slice %197 {offsets = [0, 8], sizes = [8, 8], strides = [1, 1]} : vector<8x16xf32> to vector<8x8xf32>
    %223 = arith.mulf %221, %0 : vector<8x8xf32>
    %224 = arith.mulf %222, %1 : vector<8x8xf32>
    %225 = arith.addf %223, %224 : vector<8x8xf32>
    %226 = arith.mulf %222, %0 : vector<8x8xf32>
    %227 = arith.mulf %221, %1 : vector<8x8xf32>
    %228 = arith.subf %226, %227 : vector<8x8xf32>
    %229 = tpu.concatenate %225, %228 in 1 : vector<8x8xf32>, vector<8x8xf32> -> vector<8x16xf32>
    %230 = arith.mulf %229, %229 : vector<8x16xf32>
    %cst_55 = arith.constant dense<0.000000e+00> : vector<8xf32>
    %231 = vector.multi_reduction <add>, %230, %cst_55 [1] : vector<8x16xf32> to vector<8xf32>
    %232 = vector.shape_cast %231 : vector<8xf32> to vector<8x1xf32>
    %cst_56 = arith.constant 6.250000e-02 : f32
    %233 = vector.broadcast %cst_56 : f32 to vector<8x1xf32>
    %234 = arith.mulf %232, %233 : vector<8x1xf32>
    %cst_57 = arith.constant 1.1920929E-7 : f32
    %235 = vector.broadcast %cst_57 : f32 to vector<8x1xf32>
    %236 = arith.addf %234, %235 : vector<8x1xf32>
    %237 = math.rsqrt %236 : vector<8x1xf32>
    %238 = vector.broadcast %237 : vector<8x1xf32> to vector<8x16xf32>
    %239 = arith.mulf %229, %238 : vector<8x16xf32>
    %240 = arith.truncf %239 : vector<8x16xf32> to vector<8x16xbf16>
    %cst_58 = arith.constant dense<0.000000e+00> : vector<8x8xf32>
    %241 = tpu.matmul %220, %240, %cst_58 {dimension_numbers = #tpu.dot_dimension_numbers<[1], [1], [0], [0], [0, 0, 1, 0], [], []>} : vector<8x16xbf16>, vector<8x16xbf16>, vector<8x8xf32> -> vector<8x8xf32>
    %cst_59 = arith.constant -1.000000e+30 : f32
    %242 = vector.broadcast %cst_59 : f32 to vector<8x8xf32>
    %243 = arith.select %4, %241, %242 : vector<8x8xi1>, vector<8x8xf32>
    %cst_60 = arith.constant dense<0xFF800000> : vector<8xf32>
    %244 = vector.multi_reduction <maximumf>, %243, %cst_60 [1] : vector<8x8xf32> to vector<8xf32>
    %245 = vector.shape_cast %244 : vector<8xf32> to vector<8x1xf32>
    %246 = vector.broadcast %245 : vector<8x1xf32> to vector<8x8xf32>
    %247 = arith.subf %243, %246 : vector<8x8xf32>
    %248 = math.exp %247 : vector<8x8xf32>
    %cst_61 = arith.constant dense<0.000000e+00> : vector<8xf32>
    %249 = vector.multi_reduction <add>, %248, %cst_61 [1] : vector<8x8xf32> to vector<8xf32>
    %250 = vector.shape_cast %249 : vector<8xf32> to vector<8x1xf32>
    %251 = tpu.reciprocal %250 {approx = true} : vector<8x1xf32> -> vector<8x1xf32>
    %252 = vector.broadcast %251 : vector<8x1xf32> to vector<8x8xf32>
    %253 = arith.mulf %248, %252 : vector<8x8xf32>
    %254 = arith.truncf %253 : vector<8x8xf32> to vector<8x8xbf16>
    %cst_62 = arith.constant dense<0.000000e+00> : vector<8x16xf32>
    %255 = tpu.matmul %254, %198, %cst_62 {dimension_numbers = #tpu.dot_dimension_numbers<[1], [0], [0], [1], [0, 0, 1, 1], [], []>} : vector<8x8xbf16>, vector<8x16xbf16>, vector<8x16xf32> -> vector<8x16xf32>
    %256 = arith.truncf %255 : vector<8x16xf32> to vector<8x16xbf16>
    %257 = tpu.concatenate %67, %130, %193, %256 in 1 : vector<8x16xbf16>, vector<8x16xbf16>, vector<8x16xbf16>, vector<8x16xbf16> -> vector<8x64xbf16>
    %c0_63 = arith.constant 0 : index
    %c0_64 = arith.constant 0 : index
    %258 = vector.load %arg4[%c0_63, %c0_64] : memref<8x64xbf16, #tpu.memory_space<vmem>>, vector<8x64xbf16>
    tpu.vector_store %arg4[%c0_63, %c0_64], %257 {strides = array<i32>} : memref<8x64xbf16, #tpu.memory_space<vmem>>, vector<8x64xbf16>,
    return
  }
  func.func @transform_0(%arg0: i32) -> (i32, i32) {
    %c0_i32 = arith.constant 0 : i32
    %c0_i32_0 = arith.constant 0 : i32
    return %arg0, %c0_i32 : i32, i32
  }
  func.func @transform_1(%arg0: i32) -> (i32, i32) {
    %c0_i32 = arith.constant 0 : i32
    %c0_i32_0 = arith.constant 0 : i32
    %c0_i32_1 = arith.constant 0 : i32
    return %c0_i32, %c0_i32_0 : i32, i32
  }
  func.func @transform_2(%arg0: i32) -> (i32, i32) {
    %c0_i32 = arith.constant 0 : i32
    %c0_i32_0 = arith.constant 0 : i32
    %c0_i32_1 = arith.constant 0 : i32
    return %c0_i32, %c0_i32_0 : i32, i32
  }
  func.func @transform_3(%arg0: i32) -> (i32, i32) {
    %c0_i32 = arith.constant 0 : i32
    %c0_i32_0 = arith.constant 0 : i32
    return %arg0, %c0_i32 : i32, i32
  }
}

module attributes {stable_mosaic.version = 11 : i64} {
  func.func @_rms_matmul_kernel(%arg0: i32, %arg1: i32, %arg2: memref<16x64xf32, #tpu.memory_space<vmem>>, %arg3: memref<64x192xbf16, #tpu.memory_space<vmem>>, %arg4: memref<16x192xbf16, #tpu.memory_space<vmem>>) attributes {dimension_semantics = [#tpu.dimension_semantics<parallel>, #tpu.dimension_semantics<parallel>], iteration_bounds = array<i64: 1, 1>, scalar_prefetch = 0 : i64, scratch_operands = 0 : i64, tpu.core_type = #tpu.core_type<tc>, window_params = [{transform_indices = @transform_0, window_bounds = array<i64: 16, 64>}, {transform_indices = @transform_1, window_bounds = array<i64: 64, 192>}, {transform_indices = @transform_2, window_bounds = array<i64: 16, 192>}]} {
    %c0 = arith.constant 0 : index
    %c0_0 = arith.constant 0 : index
    %0 = vector.load %arg2[%c0, %c0_0] : memref<16x64xf32, #tpu.memory_space<vmem>>, vector<16x64xf32>
    %1 = arith.mulf %0, %0 : vector<16x64xf32>
    %cst = arith.constant dense<0.000000e+00> : vector<16xf32>
    %2 = vector.multi_reduction <add>, %1, %cst [1] : vector<16x64xf32> to vector<16xf32>
    %3 = vector.shape_cast %2 : vector<16xf32> to vector<16x1xf32>
    %cst_1 = arith.constant 1.562500e-02 : f32
    %4 = vector.broadcast %cst_1 : f32 to vector<16x1xf32>
    %5 = arith.mulf %3, %4 : vector<16x1xf32>
    %cst_2 = arith.constant 1.1920929E-7 : f32
    %6 = vector.broadcast %cst_2 : f32 to vector<16x1xf32>
    %7 = arith.addf %5, %6 : vector<16x1xf32>
    %8 = math.rsqrt %7 : vector<16x1xf32>
    %9 = vector.broadcast %8 : vector<16x1xf32> to vector<16x64xf32>
    %10 = arith.mulf %0, %9 : vector<16x64xf32>
    %11 = arith.truncf %10 : vector<16x64xf32> to vector<16x64xbf16>
    %c0_3 = arith.constant 0 : index
    %c0_4 = arith.constant 0 : index
    %12 = vector.load %arg3[%c0_3, %c0_4] : memref<64x192xbf16, #tpu.memory_space<vmem>>, vector<64x192xbf16>
    %cst_5 = arith.constant dense<0.000000e+00> : vector<16x192xf32>
    %13 = tpu.matmul %11, %12, %cst_5 {dimension_numbers = #tpu.dot_dimension_numbers<[1], [0], [0], [1], [0, 0, 1, 1], [], []>} : vector<16x64xbf16>, vector<64x192xbf16>, vector<16x192xf32> -> vector<16x192xf32>
    %14 = arith.truncf %13 : vector<16x192xf32> to vector<16x192xbf16>
    %c0_6 = arith.constant 0 : index
    %c0_7 = arith.constant 0 : index
    %15 = vector.load %arg4[%c0_6, %c0_7] : memref<16x192xbf16, #tpu.memory_space<vmem>>, vector<16x192xbf16>
    tpu.vector_store %arg4[%c0_6, %c0_7], %14 {strides = array<i32>} : memref<16x192xbf16, #tpu.memory_space<vmem>>, vector<16x192xbf16>,
    return
  }
  func.func @transform_0(%arg0: i32, %arg1: i32) -> (i32, i32) {
    %c0_i32 = arith.constant 0 : i32
    %c0_i32_0 = arith.constant 0 : i32
    return %arg0, %c0_i32 : i32, i32
  }
  func.func @transform_1(%arg0: i32, %arg1: i32) -> (i32, i32) {
    %c0_i32 = arith.constant 0 : i32
    %c0_i32_0 = arith.constant 0 : i32
    return %c0_i32, %arg1 : i32, i32
  }
  func.func @transform_2(%arg0: i32, %arg1: i32) -> (i32, i32) {
    %c0_i32 = arith.constant 0 : i32
    return %arg0, %arg1 : i32, i32
  }
}

module attributes {stable_mosaic.version = 11 : i64} {
  func.func @_matmul_residual_kernel(%arg0: i32, %arg1: memref<16x64xbf16, #tpu.memory_space<vmem>>, %arg2: memref<64x64xbf16, #tpu.memory_space<vmem>>, %arg3: memref<16x64xf32, #tpu.memory_space<vmem>>, %arg4: memref<16x64xf32, #tpu.memory_space<vmem>>) attributes {dimension_semantics = [#tpu.dimension_semantics<parallel>], iteration_bounds = array<i64: 1>, scalar_prefetch = 0 : i64, scratch_operands = 0 : i64, tpu.core_type = #tpu.core_type<tc>, window_params = [{transform_indices = @transform_0, window_bounds = array<i64: 16, 64>}, {pipeline_mode = #tpu.pipeline_mode<synchronous>, transform_indices = @transform_1, window_bounds = array<i64: 64, 64>}, {transform_indices = @transform_2, window_bounds = array<i64: 16, 64>}, {transform_indices = @transform_3, window_bounds = array<i64: 16, 64>}]} {
    %c0 = arith.constant 0 : index
    %c0_0 = arith.constant 0 : index
    %0 = vector.load %arg1[%c0, %c0_0] : memref<16x64xbf16, #tpu.memory_space<vmem>>, vector<16x64xbf16>
    %c0_1 = arith.constant 0 : index
    %c0_2 = arith.constant 0 : index
    %1 = vector.load %arg2[%c0_1, %c0_2] : memref<64x64xbf16, #tpu.memory_space<vmem>>, vector<64x64xbf16>
    %cst = arith.constant dense<0.000000e+00> : vector<16x64xf32>
    %2 = tpu.matmul %0, %1, %cst {dimension_numbers = #tpu.dot_dimension_numbers<[1], [0], [0], [1], [0, 0, 1, 1], [], []>} : vector<16x64xbf16>, vector<64x64xbf16>, vector<16x64xf32> -> vector<16x64xf32>
    %c0_3 = arith.constant 0 : index
    %c0_4 = arith.constant 0 : index
    %3 = vector.load %arg3[%c0_3, %c0_4] : memref<16x64xf32, #tpu.memory_space<vmem>>, vector<16x64xf32>
    %4 = arith.addf %3, %2 : vector<16x64xf32>
    %c0_5 = arith.constant 0 : index
    %c0_6 = arith.constant 0 : index
    %5 = vector.load %arg4[%c0_5, %c0_6] : memref<16x64xf32, #tpu.memory_space<vmem>>, vector<16x64xf32>
    tpu.vector_store %arg4[%c0_5, %c0_6], %4 {strides = array<i32>} : memref<16x64xf32, #tpu.memory_space<vmem>>, vector<16x64xf32>,
    return
  }
  func.func @transform_0(%arg0: i32) -> (i32, i32) {
    %c0_i32 = arith.constant 0 : i32
    %c0_i32_0 = arith.constant 0 : i32
    return %arg0, %c0_i32 : i32, i32
  }
  func.func @transform_1(%arg0: i32) -> (i32, i32) {
    %c0_i32 = arith.constant 0 : i32
    %c0_i32_0 = arith.constant 0 : i32
    %c0_i32_1 = arith.constant 0 : i32
    return %c0_i32, %c0_i32_0 : i32, i32
  }
  func.func @transform_2(%arg0: i32) -> (i32, i32) {
    %c0_i32 = arith.constant 0 : i32
    %c0_i32_0 = arith.constant 0 : i32
    return %arg0, %c0_i32 : i32, i32
  }
  func.func @transform_3(%arg0: i32) -> (i32, i32) {
    %c0_i32 = arith.constant 0 : i32
    %c0_i32_0 = arith.constant 0 : i32
    return %arg0, %c0_i32 : i32, i32
  }
}

module attributes {stable_mosaic.version = 11 : i64} {
  func.func @_rms_mlp_residual_kernel(%arg0: i32, %arg1: memref<16x64xf32, #tpu.memory_space<vmem>>, %arg2: memref<64x256xbf16, #tpu.memory_space<vmem>>, %arg3: memref<256x64xbf16, #tpu.memory_space<vmem>>, %arg4: memref<16x64xf32, #tpu.memory_space<vmem>>) attributes {dimension_semantics = [#tpu.dimension_semantics<parallel>], iteration_bounds = array<i64: 1>, scalar_prefetch = 0 : i64, scratch_operands = 0 : i64, tpu.core_type = #tpu.core_type<tc>, window_params = [{transform_indices = @transform_0, window_bounds = array<i64: 16, 64>}, {pipeline_mode = #tpu.pipeline_mode<synchronous>, transform_indices = @transform_1, window_bounds = array<i64: 64, 256>}, {pipeline_mode = #tpu.pipeline_mode<synchronous>, transform_indices = @transform_2, window_bounds = array<i64: 256, 64>}, {transform_indices = @transform_3, window_bounds = array<i64: 16, 64>}]} {
    %c0 = arith.constant 0 : index
    %c0_0 = arith.constant 0 : index
    %0 = vector.load %arg1[%c0, %c0_0] : memref<16x64xf32, #tpu.memory_space<vmem>>, vector<16x64xf32>
    %1 = arith.mulf %0, %0 : vector<16x64xf32>
    %cst = arith.constant dense<0.000000e+00> : vector<16xf32>
    %2 = vector.multi_reduction <add>, %1, %cst [1] : vector<16x64xf32> to vector<16xf32>
    %3 = vector.shape_cast %2 : vector<16xf32> to vector<16x1xf32>
    %cst_1 = arith.constant 1.562500e-02 : f32
    %4 = vector.broadcast %cst_1 : f32 to vector<16x1xf32>
    %5 = arith.mulf %3, %4 : vector<16x1xf32>
    %cst_2 = arith.constant 1.1920929E-7 : f32
    %6 = vector.broadcast %cst_2 : f32 to vector<16x1xf32>
    %7 = arith.addf %5, %6 : vector<16x1xf32>
    %8 = math.rsqrt %7 : vector<16x1xf32>
    %9 = vector.broadcast %8 : vector<16x1xf32> to vector<16x64xf32>
    %10 = arith.mulf %0, %9 : vector<16x64xf32>
    %11 = arith.truncf %10 : vector<16x64xf32> to vector<16x64xbf16>
    %c0_3 = arith.constant 0 : index
    %c0_4 = arith.constant 0 : index
    %12 = vector.load %arg2[%c0_3, %c0_4] : memref<64x256xbf16, #tpu.memory_space<vmem>>, vector<64x256xbf16>
    %cst_5 = arith.constant dense<0.000000e+00> : vector<16x256xf32>
    %13 = tpu.matmul %11, %12, %cst_5 {dimension_numbers = #tpu.dot_dimension_numbers<[1], [0], [0], [1], [0, 0, 1, 1], [], []>} : vector<16x64xbf16>, vector<64x256xbf16>, vector<16x256xf32> -> vector<16x256xf32>
    %cst_6 = arith.constant 0.000000e+00 : f32
    %14 = vector.broadcast %cst_6 : f32 to vector<16x256xf32>
    %15 = arith.maximumf %13, %14 : vector<16x256xf32>
    %16 = arith.mulf %15, %15 : vector<16x256xf32>
    %17 = arith.truncf %16 : vector<16x256xf32> to vector<16x256xbf16>
    %c0_7 = arith.constant 0 : index
    %c0_8 = arith.constant 0 : index
    %18 = vector.load %arg3[%c0_7, %c0_8] : memref<256x64xbf16, #tpu.memory_space<vmem>>, vector<256x64xbf16>
    %cst_9 = arith.constant dense<0.000000e+00> : vector<16x64xf32>
    %19 = tpu.matmul %17, %18, %cst_9 {dimension_numbers = #tpu.dot_dimension_numbers<[1], [0], [0], [1], [0, 0, 1, 1], [], []>} : vector<16x256xbf16>, vector<256x64xbf16>, vector<16x64xf32> -> vector<16x64xf32>
    %20 = arith.addf %0, %19 : vector<16x64xf32>
    %c0_10 = arith.constant 0 : index
    %c0_11 = arith.constant 0 : index
    %21 = vector.load %arg4[%c0_10, %c0_11] : memref<16x64xf32, #tpu.memory_space<vmem>>, vector<16x64xf32>
    tpu.vector_store %arg4[%c0_10, %c0_11], %20 {strides = array<i32>} : memref<16x64xf32, #tpu.memory_space<vmem>>, vector<16x64xf32>,
    return
  }
  func.func @transform_0(%arg0: i32) -> (i32, i32) {
    %c0_i32 = arith.constant 0 : i32
    %c0_i32_0 = arith.constant 0 : i32
    return %arg0, %c0_i32 : i32, i32
  }
  func.func @transform_1(%arg0: i32) -> (i32, i32) {
    %c0_i32 = arith.constant 0 : i32
    %c0_i32_0 = arith.constant 0 : i32
    %c0_i32_1 = arith.constant 0 : i32
    return %c0_i32, %c0_i32_0 : i32, i32
  }
  func.func @transform_2(%arg0: i32) -> (i32, i32) {
    %c0_i32 = arith.constant 0 : i32
    %c0_i32_0 = arith.constant 0 : i32
    %c0_i32_1 = arith.constant 0 : i32
    return %c0_i32, %c0_i32_0 : i32, i32
  }
  func.func @transform_3(%arg0: i32) -> (i32, i32) {
    %c0_i32 = arith.constant 0 : i32
    %c0_i32_0 = arith.constant 0 : i32
    return %arg0, %c0_i32 : i32, i32
  }
}

module attributes {stable_mosaic.version = 11 : i64} {
  func.func @_rms_matmul_kernel(%arg0: i32, %arg1: i32, %arg2: memref<2x64xf32, #tpu.memory_space<vmem>>, %arg3: memref<64x96xbf16, #tpu.memory_space<vmem>>, %arg4: memref<2x96xf32, #tpu.memory_space<vmem>>) attributes {dimension_semantics = [#tpu.dimension_semantics<parallel>, #tpu.dimension_semantics<parallel>], iteration_bounds = array<i64: 1, 1>, scalar_prefetch = 0 : i64, scratch_operands = 0 : i64, tpu.core_type = #tpu.core_type<tc>, window_params = [{transform_indices = @transform_0, window_bounds = array<i64: 2, 64>}, {transform_indices = @transform_1, window_bounds = array<i64: 64, 96>}, {transform_indices = @transform_2, window_bounds = array<i64: 2, 96>}]} {
    %c0 = arith.constant 0 : index
    %c0_0 = arith.constant 0 : index
    %0 = vector.load %arg2[%c0, %c0_0] : memref<2x64xf32, #tpu.memory_space<vmem>>, vector<2x64xf32>
    %1 = arith.mulf %0, %0 : vector<2x64xf32>
    %cst = arith.constant dense<0.000000e+00> : vector<2xf32>
    %2 = vector.multi_reduction <add>, %1, %cst [1] : vector<2x64xf32> to vector<2xf32>
    %3 = vector.shape_cast %2 : vector<2xf32> to vector<2x1xf32>
    %cst_1 = arith.constant 1.562500e-02 : f32
    %4 = vector.broadcast %cst_1 : f32 to vector<2x1xf32>
    %5 = arith.mulf %3, %4 : vector<2x1xf32>
    %cst_2 = arith.constant 1.1920929E-7 : f32
    %6 = vector.broadcast %cst_2 : f32 to vector<2x1xf32>
    %7 = arith.addf %5, %6 : vector<2x1xf32>
    %8 = math.rsqrt %7 : vector<2x1xf32>
    %9 = vector.broadcast %8 : vector<2x1xf32> to vector<2x64xf32>
    %10 = arith.mulf %0, %9 : vector<2x64xf32>
    %11 = arith.truncf %10 : vector<2x64xf32> to vector<2x64xbf16>
    %c0_3 = arith.constant 0 : index
    %c0_4 = arith.constant 0 : index
    %12 = vector.load %arg3[%c0_3, %c0_4] : memref<64x96xbf16, #tpu.memory_space<vmem>>, vector<64x96xbf16>
    %cst_5 = arith.constant dense<0.000000e+00> : vector<2x96xf32>
    %13 = tpu.matmul %11, %12, %cst_5 {dimension_numbers = #tpu.dot_dimension_numbers<[1], [0], [0], [1], [0, 0, 1, 1], [], []>} : vector<2x64xbf16>, vector<64x96xbf16>, vector<2x96xf32> -> vector<2x96xf32>
    %c0_6 = arith.constant 0 : index
    %c0_7 = arith.constant 0 : index
    %14 = vector.load %arg4[%c0_6, %c0_7] : memref<2x96xf32, #tpu.memory_space<vmem>>, vector<2x96xf32>
    tpu.vector_store %arg4[%c0_6, %c0_7], %13 {strides = array<i32>} : memref<2x96xf32, #tpu.memory_space<vmem>>, vector<2x96xf32>,
    return
  }
  func.func @transform_0(%arg0: i32, %arg1: i32) -> (i32, i32) {
    %c0_i32 = arith.constant 0 : i32
    %c0_i32_0 = arith.constant 0 : i32
    return %arg0, %c0_i32 : i32, i32
  }
  func.func @transform_1(%arg0: i32, %arg1: i32) -> (i32, i32) {
    %c0_i32 = arith.constant 0 : i32
    %c0_i32_0 = arith.constant 0 : i32
    return %c0_i32, %arg1 : i32, i32
  }
  func.func @transform_2(%arg0: i32, %arg1: i32) -> (i32, i32) {
    %c0_i32 = arith.constant 0 : i32
    return %arg0, %arg1 : i32, i32
  }
}

</mosaic_0001>

<llo_original>
// kernel: gpt_forward.9
$region0: #{gpt_forward.9}
  #allocation0 [shape = 'u32[]', space=smem, size = 0x4, offset = 0x4, fixed_abs, tag = 'smem constant byte address 0x4 - core index']
  #allocation1 [shape = 'u32[144,128]{1,0:T(1,128)}', space=vmem, size = 0x12000, scoped, tag = 'internal scratch']
  %s0 = inlined_call_operand.vmem [shape: f32[16,64], index: 0, kind: input, shape index: {}]
  %s1 = inlined_call_operand.vmem [shape: bf16[64,192], index: 1, kind: input, shape index: {}]
  %s2 = inlined_call_operand.vmem [shape: bf16[16,192], index: 2, kind: output, shape index: {}]
  %s3 = sld [smem:[#allocation0]]
  $region18: #{gpt_forward.9} parent=0
    _
  %s5 = ssub.s32 1, %s3
  %s6 = scalar_select 0, %s5, %s3
  // Predicated region
  $region2: #{gpt_forward.9} parent=0 // pred_check
    _
  $region3: #{gpt_forward.9} parent=0 // pred_check_branch
    %8 = sbr.rel (0) target = $region5
  $region4: #{gpt_forward.9} parent=0 // pred_region
    _
  $region5: #{gpt_forward.9} parent=0 // pred_fallthru
    _
  // Predicated region
  $region6: #{gpt_forward.9} parent=0 // pred_check
    _
  $region7: #{gpt_forward.9} parent=0 // pred_check_branch
    %10 = sbr.rel (0) target = $region9
  $region8: #{gpt_forward.9} parent=0 // pred_region
    _
  $region9: #{gpt_forward.9} parent=0 // pred_fallthru
    _
  %v12 = vld [vmem:[%s0] sm:$0xff]
  %v13 = vld [vmem:[%s0 + $0x8] sm:$0xff]
  %v14 = vmul.f32 %v12, %v12
  %v15 = vmul.f32 %v13, %v13
  %vm16 = vcmask 523264
  %v17 = vsel %vm16, %v14, 0.0
  %18 = vadd.xlane.f32.xlu0 %v17
  %v19 = vpop.xlane.xlu0 %18
  %v20 = vsel %vm16, %v15, 0.0
  %21 = vadd.xlane.f32.xlu0 %v20
  %v22 = vpop.xlane.xlu0 %21
  %v23 = vmul.f32 %v19, 0.015625
  %v24 = vmul.f32 %v22, 0.015625
  %v25 = vadd.f32 %v23, 1.1920929e-07
  %v26 = vadd.f32 %v24, 1.1920929e-07
  %v27 = vrsqrt.pop %v25
  %v28 = vrsqrt.pop %v26
  %v29 = vmul.f32 %v12, %v27
  %v30 = vmul.f32 %v13, %v28
  %v31 = vpack.c.bf16 %v30, %v29
  %v32 = vld [vmem:[%s1] sm:$0xff]
  %v33 = vld [vmem:[%s1 + $0x8] sm:$0xff]
  %v34 = vld [vmem:[%s1 + $0x10] sm:$0xff]
  %v35 = vld [vmem:[%s1 + $0x18] sm:$0xff]
  %v36 = vld [vmem:[%s1 + $0x20] sm:$0xff]
  %v37 = vld [vmem:[%s1 + $0x28] sm:$0xff]
  %v38 = vld [vmem:[%s1 + $0x30] sm:$0xff]
  %v39 = vld [vmem:[%s1 + $0x38] sm:$0xff]
  %v48 = vunpack.c.l.b16 %v32
  %v49 = vunpack.c.h.b16 %v32
  %v50 = vunpack.c.l.b16 %v33
  %v51 = vunpack.c.h.b16 %v33
  %v52 = vunpack.c.l.b16 %v34
  %v53 = vunpack.c.h.b16 %v34
  %v54 = vunpack.c.l.b16 %v35
  %v55 = vunpack.c.h.b16 %v35
  %v56 = vunpack.c.l.b16 %v36
  %v57 = vunpack.c.h.b16 %v36
  %v58 = vunpack.c.l.b16 %v37
  %v59 = vunpack.c.h.b16 %v37
  %v60 = vunpack.c.l.b16 %v38
  %v61 = vunpack.c.h.b16 %v38
  %v62 = vunpack.c.l.b16 %v39
  %v63 = vunpack.c.h.b16 %v39
  %v64 = vpack.c.b16 %v50, %v48
  %v65 = vpack.c.b16 %v51, %v49
  %v66 = vpack.c.b16 %v54, %v52
  %v67 = vpack.c.b16 %v55, %v53
  %v68 = vpack.c.b16 %v58, %v56
  %v69 = vpack.c.b16 %v59, %v57
  %v70 = vpack.c.b16 %v62, %v60
  %v71 = vpack.c.b16 %v63, %v61
  %v81 = vsel %vm16, %v31, 0
  %83 = vmatprep.subr.bf16.mxu0 %v65
  %84 = vmatpush1.bf16.msra.mxu0 %v64
  %85 = vmatprep.subr.bf16.mxu0 %v67
  %86 = vmatpush1.bf16.msra.mxu0 %v66
  %87 = vmatprep.subr.bf16.mxu0 %v69
  %88 = vmatpush1.bf16.msra.mxu0 %v68
  %89 = vmatprep.subr.bf16.mxu0 %v71
  %90 = vmatpush1.bf16.msra.mxu0 %v70
  %91 = vmatprep.subr.bf16.mxu0 0
  %92 = vmatpush1.bf16.msra.mxu0 0
  %93 = vmatprep.subr.bf16.mxu0 0
  %94 = vmatpush1.bf16.msra.mxu0 0
  %95 = vmatprep.subr.bf16.mxu0 0
  %96 = vmatpush1.bf16.msra.mxu0 0
  %97 = vmatprep.subr.bf16.mxu0 0
  %98 = vmatpush1.bf16.msra.mxu0 0
  %99 = vmatprep.subr.bf16.mxu0 0
  %100 = vmatpush1.bf16.msra.mxu0 0
  %101 = vmatprep.subr.bf16.mxu0 0
  %102 = vmatpush1.bf16.msra.mxu0 0
  %103 = vmatprep.subr.bf16.mxu0 0
  %104 = vmatpush1.bf16.msra.mxu0 0
  %105 = vmatprep.subr.bf16.mxu0 0
  %106 = vmatpush1.bf16.msra.mxu0 0
  %107 = vmatprep.subr.bf16.mxu0 0
  %108 = vmatpush1.bf16.msra.mxu0 0
  %109 = vmatprep.subr.bf16.mxu0 0
  %110 = vmatpush1.bf16.msra.mxu0 0
  %111 = vmatprep.subr.bf16.mxu0 0
  %112 = vmatpush1.bf16.msra.mxu0 0
  %113 = vmatprep.subr.bf16.mxu0 0
  %114 = vmatpush1.bf16.msra.mxu0 0
  %115 = vmatprep.mubr.bf16.mxu0 0
  %116 = vmatmul.mubr.bf16.gmra.mrb[0].mxu0 %v81
  %v117 = vpop.f32.mrb[0].mxu0
  %v118 = vadd.f32 0.0, %v117
  %v119 = vpop.f32.mrb[0].mxu0
  %v120 = vadd.f32 0.0, %v119
  %v121 = vpop.f32.mrb[0].mxu0
  %v122 = vadd.f32 0.0, %v121
  %v123 = vpop.f32.mrb[0].mxu0
  %v124 = vadd.f32 0.0, %v123
  %125 = vdwg.mxu0
  %v126 = vpack.c.bf16 %v122, %v118
  %v127 = vpack.c.bf16 %v124, %v120
  %v130 = vunpack.c.l.b16 %v126
  %v131 = vunpack.c.l.b16 %v127
  %v132 = vunpack.c.h.b16 %v126
  %v133 = vunpack.c.h.b16 %v127
  %v134 = vpack.c.b16 %v131, %v130
  %v135 = vpack.c.b16 %v133, %v132
  %vm138 = vcmask 1043456
  %vm139 = vcmask 523268
  %vm140 = vmor %vm139, %vm138
  %141 = vst.msk [vmem:[%s2] sm:$0xff] %vm140, %v134
  %142 = vst.msk [vmem:[%s2 + $0x8] sm:$0xff] %vm140, %v135
  // Predicated region
  $region10: #{gpt_forward.9} parent=0 // pred_check
    _
  $region11: #{gpt_forward.9} parent=0 // pred_check_branch
    %144 = sbr.rel (0) target = $region13
  $region12: #{gpt_forward.9} parent=0 // pred_region
    _
  $region13: #{gpt_forward.9} parent=0 // pred_fallthru
    _
  // Predicated region
  $region14: #{gpt_forward.9} parent=0 // pred_check
    _
  $region15: #{gpt_forward.9} parent=0 // pred_check_branch
    %146 = sbr.rel (0) target = $region17
  $region16: #{gpt_forward.9} parent=0 // pred_region
    _
  $region17: #{gpt_forward.9} parent=0 // pred_fallthru
    _

// kernel: gpt_forward.11
$region0: #{gpt_forward.11}
  #allocation0 [shape = 'u32[]', space=smem, size = 0x4, offset = 0x4, fixed_abs, tag = 'smem constant byte address 0x4 - core index']
  #allocation1 [shape = 'u32[144,128]{1,0:T(1,128)}', space=vmem, size = 0x12000, scoped, tag = 'internal scratch']
  %s0 = inlined_call_operand.vmem [shape: bf16[16,64], index: 0, kind: input, shape index: {}]
  %s1 = inlined_call_operand.vmem [shape: bf16[64,64], index: 1, kind: input, shape index: {}]
  %s2 = inlined_call_operand.vmem [shape: f32[16,64], index: 2, kind: input, shape index: {}]
  %s3 = inlined_call_operand.vmem [shape: f32[16,64], index: 3, kind: output, shape index: {}]
  %s4 = sld [smem:[#allocation0]]
  $region22: #{gpt_forward.11} parent=0
    _
  %s6 = ssub.s32 1, %s4
  %s7 = scalar_select 0, %s6, %s4
  // Predicated region
  $region2: #{gpt_forward.11} parent=0 // pred_check
    _
  $region3: #{gpt_forward.11} parent=0 // pred_check_branch
    %9 = sbr.rel (0) target = $region5
  $region4: #{gpt_forward.11} parent=0 // pred_region
    _
  $region5: #{gpt_forward.11} parent=0 // pred_fallthru
    _
  // Predicated region
  $region6: #{gpt_forward.11} parent=0 // pred_check
    _
  $region7: #{gpt_forward.11} parent=0 // pred_check_branch
    %11 = sbr.rel (0) target = $region9
  $region8: #{gpt_forward.11} parent=0 // pred_region
    _
  $region9: #{gpt_forward.11} parent=0 // pred_fallthru
    _
  // Predicated region
  $region10: #{gpt_forward.11} parent=0 // pred_check
    _
  $region11: #{gpt_forward.11} parent=0 // pred_check_branch
    %13 = sbr.rel (0) target = $region13
  $region12: #{gpt_forward.11} parent=0 // pred_region
    _
  $region13: #{gpt_forward.11} parent=0 // pred_fallthru
    _
  %v15 = vld [vmem:[%s0] sm:$0xf]
  %v16 = vld [vmem:[%s0 + $0x4] sm:$0xf]
  %v17 = vld [vmem:[%s1] sm:$0xf]
  %v18 = vld [vmem:[%s1 + $0x4] sm:$0xf]
  %v19 = vld [vmem:[%s1 + $0x8] sm:$0xf]
  %v20 = vld [vmem:[%s1 + $0xc] sm:$0xf]
  %v21 = vld [vmem:[%s1 + $0x10] sm:$0xf]
  %v22 = vld [vmem:[%s1 + $0x14] sm:$0xf]
  %v23 = vld [vmem:[%s1 + $0x18] sm:$0xf]
  %v24 = vld [vmem:[%s1 + $0x1c] sm:$0xf]
  %v27 = vunpack.c.l.b16 %v15
  %v28 = vunpack.c.l.b16 %v16
  %v29 = vpack.c.b16 %v28, %v27
  %v38 = vunpack.c.l.b16 %v17
  %v39 = vunpack.c.l.b16 %v18
  %v40 = vunpack.c.l.b16 %v19
  %v41 = vunpack.c.l.b16 %v20
  %v42 = vunpack.c.l.b16 %v21
  %v43 = vunpack.c.l.b16 %v22
  %v44 = vunpack.c.l.b16 %v23
  %v45 = vunpack.c.l.b16 %v24
  %v46 = vpack.c.b16 %v39, %v38
  %v47 = vpack.c.b16 %v41, %v40
  %v48 = vpack.c.b16 %v43, %v42
  %v49 = vpack.c.b16 %v45, %v44
  %vm54 = vcmask 523264
  %v56 = vsel %vm54, %v29, 0
  %58 = vmatprep.subr.bf16.mxu0 0
  %59 = vmatpush1.bf16.msra.mxu0 %v46
  %60 = vmatprep.subr.bf16.mxu0 0
  %61 = vmatpush1.bf16.msra.mxu0 %v47
  %62 = vmatprep.subr.bf16.mxu0 0
  %63 = vmatpush1.bf16.msra.mxu0 %v48
  %64 = vmatprep.subr.bf16.mxu0 0
  %65 = vmatpush1.bf16.msra.mxu0 %v49
  %66 = vmatprep.subr.bf16.mxu0 0
  %67 = vmatpush1.bf16.msra.mxu0 0
  %68 = vmatprep.subr.bf16.mxu0 0
  %69 = vmatpush1.bf16.msra.mxu0 0
  %70 = vmatprep.subr.bf16.mxu0 0
  %71 = vmatpush1.bf16.msra.mxu0 0
  %72 = vmatprep.subr.bf16.mxu0 0
  %73 = vmatpush1.bf16.msra.mxu0 0
  %74 = vmatprep.subr.bf16.mxu0 0
  %75 = vmatpush1.bf16.msra.mxu0 0
  %76 = vmatprep.subr.bf16.mxu0 0
  %77 = vmatpush1.bf16.msra.mxu0 0
  %78 = vmatprep.subr.bf16.mxu0 0
  %79 = vmatpush1.bf16.msra.mxu0 0
  %80 = vmatprep.subr.bf16.mxu0 0
  %81 = vmatpush1.bf16.msra.mxu0 0
  %82 = vmatprep.subr.bf16.mxu0 0
  %83 = vmatpush1.bf16.msra.mxu0 0
  %84 = vmatprep.subr.bf16.mxu0 0
  %85 = vmatpush1.bf16.msra.mxu0 0
  %86 = vmatprep.subr.bf16.mxu0 0
  %87 = vmatpush1.bf16.msra.mxu0 0
  %88 = vmatprep.subr.bf16.mxu0 0
  %89 = vmatpush1.bf16.msra.mxu0 0
  %90 = vmatprep.mubr.bf16.mxu0 0
  %91 = vmatmul.mubr.bf16.gmra.mrb[0].mxu0 %v56
  %v92 = vpop.f32.mrb[0].mxu0
  %v93 = vadd.f32 0.0, %v92
  %v94 = vpop.f32.mrb[0].mxu0
  %v95 = vpop.f32.mrb[0].mxu0
  %v96 = vadd.f32 0.0, %v95
  %v97 = vpop.f32.mrb[0].mxu0
  %98 = vdwg.mxu0
  %v99 = vld [vmem:[%s2] sm:$0xff]
  %v100 = vld [vmem:[%s2 + $0x8] sm:$0xff]
  %v101 = vadd.f32 %v99, %v93
  %v102 = vadd.f32 %v100, %v96
  %103 = vst.msk [vmem:[%s3] sm:$0xff] %vm54, %v101
  %104 = vst.msk [vmem:[%s3 + $0x8] sm:$0xff] %vm54, %v102
  // Predicated region
  $region14: #{gpt_forward.11} parent=0 // pred_check
    _
  $region15: #{gpt_forward.11} parent=0 // pred_check_branch
    %106 = sbr.rel (0) target = $region17
  $region16: #{gpt_forward.11} parent=0 // pred_region
    _
  $region17: #{gpt_forward.11} parent=0 // pred_fallthru
    _
  // Predicated region
  $region18: #{gpt_forward.11} parent=0 // pred_check
    _
  $region19: #{gpt_forward.11} parent=0 // pred_check_branch
    %108 = sbr.rel (0) target = $region21
  $region20: #{gpt_forward.11} parent=0 // pred_region
    _
  $region21: #{gpt_forward.11} parent=0 // pred_fallthru
    _

// kernel: gpt_forward.10
$region0: #{gpt_forward.10}
  #allocation0 [shape = 'u32[]', space=smem, size = 0x4, offset = 0x4, fixed_abs, tag = 'smem constant byte address 0x4 - core index']
  #allocation1 [shape = 'u32[144,128]{1,0:T(1,128)}', space=vmem, size = 0x12000, scoped, tag = 'internal scratch']
  %s0 = inlined_call_operand.vmem [shape: bf16[16,192], index: 0, kind: input, shape index: {}]
  %s1 = inlined_call_operand.vmem [shape: f32[8,8], index: 1, kind: input, shape index: {}]
  %s2 = inlined_call_operand.vmem [shape: f32[8,8], index: 2, kind: input, shape index: {}]
  %s3 = inlined_call_operand.vmem [shape: bf16[16,64], index: 3, kind: output, shape index: {}]
  %s4 = sld [smem:[#allocation0]]
  $region45: #{gpt_forward.10} parent=0
    _
  %s6 = ssub.s32 1, %s4
  %s7 = scalar_select 0, %s6, %s4
  loop: start=0, step=1, limit=4
  $region2: #{gpt_forward.10} parent=0 // loop_pre_header
    _
  $region3: #{gpt_forward.10} parent=0 // loop_header
    %s9 = sphi 0, %s13
    %p10 = scmp.ge.s32.totalorder %s9, 4
    %s19 = sphi 0, %s21
    %s22 = sphi 0, %s19
    %s23 = sphi 0, %s22
    %s39 = sphi 0, %s23
    %s43 = sphi 0, %s43
    %s45 = sphi 0, %s43
    %s46 = sphi 0, %s45
    %s60 = sphi 0, %s46
    %s64 = sphi 0, %s64
    %s66 = sphi 0, %s64
    %s67 = sphi 0, %s66
    %s81 = sphi 0, %s67
    %s87 = sphi 0, %s89
    %s90 = sphi 0, %s87
    %s91 = sphi 0, %s90
    %s107 = sphi 0, %s91
  $region4: #{gpt_forward.10} parent=0 // loop_header_branch
    %12 = sbr.rel (%p10) target = $region8
  $region5: #{gpt_forward.10} parent=0 // loop_body
    %s14 = ssub.s32 %s9, 1
    %s15 = ssub.s32 %s9, 2
    %s16 = sadd.s32 %s9, 1
    %s17 = ssub.s32 %s9, %s16
    %p18 = scmp.eq.s32.totalorder %s17, 0
    %s20 = sadd.s32 %s19, 1
    %s21 = scalar_select %p18, %s19, %s20
    %p24 = pneg %p18
    %p25 = scmp.eq.s32.totalorder %s9, 1
    %p26 = por %p24, %p25
    %p27 = scmp.ne.s32.totalorder %s19, %s22
    %p28 = scmp.eq.s32.totalorder %s9, 0
    %p29 = por %p27, %p28
    %p30 = scmp.ne.s32.totalorder %s19, %s22
    %p31 = scmp.eq.s32.totalorder %s14, 1
    %p32 = por %p30, %p31
    %p33 = scmp.ne.s32.totalorder %s22, %s23
    %p34 = scmp.eq.s32.totalorder %s14, 0
    %p35 = por %p33, %p34
    %p36 = scmp.ne.s32.totalorder %s22, %s23
    %p37 = scmp.eq.s32.totalorder %s15, 1
    %p38 = por %p36, %p37
    %p40 = scmp.ne.s32.totalorder %s23, %s39
    %p41 = scmp.eq.s32.totalorder %s15, 0
    %p42 = por %p40, %p41
    %s44 = sadd.s32 %s43, 1
    %p47 = scmp.eq.s32.totalorder %s9, 1
    %p48 = scmp.ne.s32.totalorder %s43, %s45
    %p49 = scmp.eq.s32.totalorder %s9, 0
    %p50 = por %p48, %p49
    %p51 = scmp.ne.s32.totalorder %s43, %s45
    %p52 = scmp.eq.s32.totalorder %s14, 1
    %p53 = por %p51, %p52
    %p54 = scmp.ne.s32.totalorder %s45, %s46
    %p55 = scmp.eq.s32.totalorder %s14, 0
    %p56 = por %p54, %p55
    %p57 = scmp.ne.s32.totalorder %s45, %s46
    %p58 = scmp.eq.s32.totalorder %s15, 1
    %p59 = por %p57, %p58
    %p61 = scmp.ne.s32.totalorder %s46, %s60
    %p62 = scmp.eq.s32.totalorder %s15, 0
    %p63 = por %p61, %p62
    %s65 = sadd.s32 %s64, 1
    %p68 = scmp.eq.s32.totalorder %s9, 1
    %p69 = scmp.ne.s32.totalorder %s64, %s66
    %p70 = scmp.eq.s32.totalorder %s9, 0
    %p71 = por %p69, %p70
    %p72 = scmp.ne.s32.totalorder %s64, %s66
    %p73 = scmp.eq.s32.totalorder %s14, 1
    %p74 = por %p72, %p73
    %p75 = scmp.ne.s32.totalorder %s66, %s67
    %p76 = scmp.eq.s32.totalorder %s14, 0
    %p77 = por %p75, %p76
    %p78 = scmp.ne.s32.totalorder %s66, %s67
    %p79 = scmp.eq.s32.totalorder %s15, 1
    %p80 = por %p78, %p79
    %p82 = scmp.ne.s32.totalorder %s67, %s81
    %p83 = scmp.eq.s32.totalorder %s15, 0
    %p84 = por %p82, %p83
    %s85 = ssub.s32 %s9, %s16
    %p86 = scmp.eq.s32.totalorder %s85, 0
    %s88 = sadd.s32 %s87, 1
    %s89 = scalar_select %p86, %s87, %s88
    %p92 = pneg %p86
    %p93 = scmp.eq.s32.totalorder %s9, 1
    %p94 = por %p92, %p93
    %p95 = scmp.ne.s32.totalorder %s87, %s90
    %p96 = scmp.eq.s32.totalorder %s9, 0
    %p97 = por %p95, %p96
    %p98 = scmp.ne.s32.totalorder %s87, %s90
    %p99 = scmp.eq.s32.totalorder %s14, 1
    %p100 = por %p98, %p99
    %p101 = scmp.ne.s32.totalorder %s90, %s91
    %p102 = scmp.eq.s32.totalorder %s14, 0
    %p103 = por %p101, %p102
    %p104 = scmp.ne.s32.totalorder %s90, %s91
    %p105 = scmp.eq.s32.totalorder %s15, 1
    %p106 = por %p104, %p105
    %p108 = scmp.ne.s32.totalorder %s91, %s107
    %p109 = scmp.eq.s32.totalorder %s15, 0
    %p110 = por %p108, %p109
    %p111 = scmp.le.s32.totalorder 1, %s9
    %p112 = scmp.lt.s32.totalorder %s9, 3
    %p113 = pnand %p111, %p112
    %p114 = pneg %p113
    // Predicated region
    $region9: #{gpt_forward.10} parent=5 // pred_check
      _
    $region10: #{gpt_forward.10} parent=5 // pred_check_branch
      %116 = sbr.rel (%p113) target = $region12
    $region11: #{gpt_forward.10} parent=5 // pred_region
      %s117 = ssub.s32 %s9, 1
      // Predicated region
      $region13: #{gpt_forward.10} parent=11 // pred_check
        %p118 = pneg %p56
      $region14: #{gpt_forward.10} parent=11 // pred_check_branch
        %120 = sbr.rel (%p118) target = $region16
      $region15: #{gpt_forward.10} parent=11 // pred_region
        _
      $region16: #{gpt_forward.10} parent=11 // pred_fallthru
        _
      // Predicated region
      $region17: #{gpt_forward.10} parent=11 // pred_check
        %p121 = pneg %p77
      $region18: #{gpt_forward.10} parent=11 // pred_check_branch
        %123 = sbr.rel (%p121) target = $region20
      $region19: #{gpt_forward.10} parent=11 // pred_region
        _
      $region20: #{gpt_forward.10} parent=11 // pred_fallthru
        _
    $region12: #{gpt_forward.10} parent=5 // pred_fallthru
      _
    %p124 = scmp.lt.s32.totalorder %s9, 2
    // Predicated region
    $region21: #{gpt_forward.10} parent=5 // pred_check
      %p125 = pneg %p124
    $region22: #{gpt_forward.10} parent=5 // pred_check_branch
      %127 = sbr.rel (%p125) target = $region24
    $region23: #{gpt_forward.10} parent=5 // pred_region
      // Predicated region
      $region25: #{gpt_forward.10} parent=23 // pred_check
        %p128 = pneg %p29
      $region26: #{gpt_forward.10} parent=23 // pred_check_branch
        %130 = sbr.rel (%p128) target = $region28
      $region27: #{gpt_forward.10} parent=23 // pred_region
        %p131 = scmp.lt.s32.totalorder %s9, 1
        %s132 = scalar_select %p131, %s9, 1
        %s133 = smul.addr %s132, 2
        %s134 = smul.addr %s133, 4
        %s135 = scalar_lea.vmem %s0, %s134
      $region28: #{gpt_forward.10} parent=23 // pred_fallthru
        _
    $region24: #{gpt_forward.10} parent=5 // pred_fallthru
      _
    %p136 = scmp.le.s32.totalorder 1, %s9
    %p137 = scmp.lt.s32.totalorder %s9, 3
    %p138 = pnand %p136, %p137
    %p139 = pneg %p138
    // Predicated region
    $region29: #{gpt_forward.10} parent=5 // pred_check
      _
    $region30: #{gpt_forward.10} parent=5 // pred_check_branch
      %141 = sbr.rel (%p138) target = $region32
    $region31: #{gpt_forward.10} parent=5 // pred_region
      %s142 = ssub.s32 %s9, 1
      %p143 = scmp.lt.s32.totalorder %s14, 1
      %s144 = scalar_select %p143, %s14, 1
      %s145 = smul.addr %s144, 2
      %s146 = smul.addr %s145, 4
      %s147 = scalar_lea.vmem %s0, %s146
      %p148 = pneg %p35
      %p149 = pneg %p32
      %p150 = pneg %p56
      %p151 = pneg %p53
      %p152 = pneg %p77
      %p153 = pneg %p74
      %p154 = pneg %p103
      %p155 = pneg %p100
      %p156 = scmp.lt.s32.totalorder %s14, 1
      %s157 = scalar_select %p156, %s14, 1
      %s158 = smul.addr %s157, 4
      %s159 = scalar_lea.vmem %s3, %s158
      %p160 = scmp.lt.s32.totalorder %s14, 1
      %s161 = scalar_select %p160, %s14, 1
      %s162 = smul.addr %s161, 2
      %s163 = smul.addr %s162, 4
      %s164 = scalar_lea.vmem %s0, %s163
      %p165 = scmp.lt.s32.totalorder %s14, 1
      %s166 = scalar_select %p165, %s14, 1
      %s167 = smul.addr %s166, 4
      %s168 = scalar_lea.vmem %s3, %s167
      %v170 = vld [vmem:[%s1] sm:$0xff]
      %v171 = vld [vmem:[%s2] sm:$0xff]
      %v172 = vlaneseq
      %v173 = vshrl.u32 %v172, 7
      %v174 = vlaneseq
      %v175 = vand.u32 %v174, 127
      %vm176 = vcmp.le.s32.totalorder %v175, %v173
      %v177 = vld [vmem:[%s164] sm:$0xf]
      %v178 = vunpack.c.l.bf16 %v177
      %v179 = vld [vmem:[%s164 + $0x4] sm:$0xf]
      %v180 = vmul.f32 %v178, %v170
      %182 = vrot.lane.b32.xlu0 %v171, 8
      %v183 = vpop.permute.xlu0 %182
      %v185 = vmul.f32 %v178, %v183
      %187 = vrot.lane.b32.xlu0 %v185, 120
      %v188 = vpop.permute.xlu0 %187
      %v190 = vadd.f32 %v180, %v188
      %192 = vrot.lane.b32.xlu0 %v170, 8
      %v193 = vpop.permute.xlu0 %192
      %v195 = vmul.f32 %v178, %v193
      %v196 = vmul.f32 %v178, %v171
      %198 = vrot.lane.b32.xlu0 %v196, 8
      %v199 = vpop.permute.xlu0 %198
      %v201 = vsub.f32 %v195, %v199
      %vm202 = vcmask 64512
      %v203 = vsel %vm202, %v190, %v201
      %v204 = vmul.f32 %v203, %v203
      %vm205 = vcmask 130048
      %v206 = vsel %vm205, %v204, 0.0
      %207 = vadd.xlane.f32.xlu0 %v206
      %v208 = vpop.xlane.xlu0 %207
      %v209 = vmul.f32 %v208, 0.0625
      %v210 = vadd.f32 %v209, 1.1920929e-07
      %v211 = vrsqrt.pop %v210
      %v212 = vmul.f32 %v203, %v211
      %v213 = vmul.f32 %v212, 0.25
      %v214 = vpack.c.bf16 %v213, %v213
      %215 = vrot.lane.b32.xlu0 %v170, 64
      %v216 = vpop.permute.xlu0 %215
      %v218 = vmul.f32 %v178, %v216
      %219 = vrot.lane.b32.xlu0 %v171, 72
      %v220 = vpop.permute.xlu0 %219
      %v222 = vmul.f32 %v178, %v220
      %224 = vrot.lane.b32.xlu0 %v222, 120
      %v225 = vpop.permute.xlu0 %224
      %v227 = vadd.f32 %v218, %v225
      %228 = vrot.lane.b32.xlu0 %v170, 72
      %v229 = vpop.permute.xlu0 %228
      %v231 = vmul.f32 %v178, %v229
      %232 = vrot.lane.b32.xlu0 %v171, 64
      %v233 = vpop.permute.xlu0 %232
      %v235 = vmul.f32 %v178, %v233
      %237 = vrot.lane.b32.xlu0 %v235, 8
      %v238 = vpop.permute.xlu0 %237
      %v240 = vsub.f32 %v231, %v238
      %242 = vrot.lane.b32.xlu0 %v227, 64
      %v243 = vpop.permute.xlu0 %242
      %246 = vrot.lane.b32.xlu0 %v240, 64
      %v247 = vpop.permute.xlu0 %246
      %v249 = vsel %vm202, %v243, %v247
      %v250 = vmul.f32 %v249, %v249
      %v251 = vsel %vm205, %v250, 0.0
      %252 = vadd.xlane.f32.xlu0 %v251
      %v253 = vpop.xlane.xlu0 %252
      %v254 = vmul.f32 %v253, 0.0625
      %v255 = vadd.f32 %v254, 1.1920929e-07
      %v256 = vrsqrt.pop %v255
      %v257 = vmul.f32 %v249, %v256
      %v258 = vpack.c.bf16 %v257, %v257
      %v260 = vsel %vm205, %v214, 0
      %v263 = vsel %vm205, %v258, 0
      %265 = vmatprep.subr.bf16.mxu0 0
      %266 = vmatpush1.bf16.xpose.msra.mxu0 %v263
      %267 = vmatprep.subr.bf16.mxu0 0
      %268 = vmatpush1.bf16.xpose.msra.mxu0 0
      %269 = vmatprep.subr.bf16.mxu0 0
      %270 = vmatpush1.bf16.xpose.msra.mxu0 0
      %271 = vmatprep.subr.bf16.mxu0 0
      %272 = vmatpush1.bf16.xpose.msra.mxu0 0
      %273 = vmatprep.subr.bf16.mxu0 0
      %274 = vmatpush1.bf16.xpose.msra.mxu0 0
      %275 = vmatprep.subr.bf16.mxu0 0
      %276 = vmatpush1.bf16.xpose.msra.mxu0 0
      %277 = vmatprep.subr.bf16.mxu0 0
      %278 = vmatpush1.bf16.xpose.msra.mxu0 0
      %279 = vmatprep.subr.bf16.mxu0 0
      %280 = vmatpush1.bf16.xpose.msra.mxu0 0
      %281 = vmatprep.subr.bf16.mxu0 0
      %282 = vmatpush1.bf16.xpose.msra.mxu0 0
      %283 = vmatprep.subr.bf16.mxu0 0
      %284 = vmatpush1.bf16.xpose.msra.mxu0 0
      %285 = vmatprep.subr.bf16.mxu0 0
      %286 = vmatpush1.bf16.xpose.msra.mxu0 0
      %287 = vmatprep.subr.bf16.mxu0 0
      %288 = vmatpush1.bf16.xpose.msra.mxu0 0
      %289 = vmatprep.subr.bf16.mxu0 0
      %290 = vmatpush1.bf16.xpose.msra.mxu0 0
      %291 = vmatprep.subr.bf16.mxu0 0
      %292 = vmatpush1.bf16.xpose.msra.mxu0 0
      %293 = vmatprep.subr.bf16.mxu0 0
      %294 = vmatpush1.bf16.xpose.msra.mxu0 0
      %295 = vmatprep.subr.bf16.mxu0 0
      %296 = vmatpush1.bf16.xpose.msra.mxu0 0
      %297 = vmatprep.mubr.bf16.mxu0 0
      %298 = vmatmul.mubr.bf16.gmra.mrb[0].mxu0 %v260
      %v299 = vpop.f32.mrb[0].mxu0
      %v300 = vadd.f32 0.0, %v299
      %v301 = vpop.f32.mrb[0].mxu0
      %v302 = vpop.f32.mrb[0].mxu0
      %v303 = vpop.f32.mrb[0].mxu0
      %304 = vdwg.mxu0
      %v305 = vsel %vm176, %v300, -1e+30
      %v306 = vsel %vm202, %v305, -inf
      %307 = vmax.xlane.f32.xlu0 %v306
      %v308 = vpop.xlane.xlu0 %307
      %v309 = vsub.f32 %v305, %v308
      %v310 = vmul.f32 %v309, 1.442695
      %v311 = vpow.pop %v310
      %v312 = vsel %vm202, %v311, 0.0
      %313 = vadd.xlane.f32.xlu0 %v312
      %v314 = vpop.xlane.xlu0 %313
      %v315 = vrcp.pop %v314
      %v316 = vmul.f32 %v311, %v315
      %v317 = vpack.c.bf16 %v316, %v316
      %v319 = vsel %vm202, %v317, 0
      %vm321 = vcmask 1043456
      %v323 = vsel %vm321, %v179, 0
      %325 = vmatprep.subr.bf16.mxu0 0
      %326 = vmatpush1.bf16.msra.mxu0 %v323
      %327 = vmatprep.subr.bf16.mxu0 0
      %328 = vmatpush1.bf16.msra.mxu0 0
      %329 = vmatprep.subr.bf16.mxu0 0
      %330 = vmatpush1.bf16.msra.mxu0 0
      %331 = vmatprep.subr.bf16.mxu0 0
      %332 = vmatpush1.bf16.msra.mxu0 0
      %333 = vmatprep.subr.bf16.mxu0 0
      %334 = vmatpush1.bf16.msra.mxu0 0
      %335 = vmatprep.subr.bf16.mxu0 0
      %336 = vmatpush1.bf16.msra.mxu0 0
      %337 = vmatprep.subr.bf16.mxu0 0
      %338 = vmatpush1.bf16.msra.mxu0 0
      %339 = vmatprep.subr.bf16.mxu0 0
      %340 = vmatpush1.bf16.msra.mxu0 0
      %341 = vmatprep.subr.bf16.mxu0 0
      %342 = vmatpush1.bf16.msra.mxu0 0
      %343 = vmatprep.subr.bf16.mxu0 0
      %344 = vmatpush1.bf16.msra.mxu0 0
      %345 = vmatprep.subr.bf16.mxu0 0
      %346 = vmatpush1.bf16.msra.mxu0 0
      %347 = vmatprep.subr.bf16.mxu0 0
      %348 = vmatpush1.bf16.msra.mxu0 0
      %349 = vmatprep.subr.bf16.mxu0 0
      %350 = vmatpush1.bf16.msra.mxu0 0
      %351 = vmatprep.subr.bf16.mxu0 0
      %352 = vmatpush1.bf16.msra.mxu0 0
      %353 = vmatprep.subr.bf16.mxu0 0
      %354 = vmatpush1.bf16.msra.mxu0 0
      %355 = vmatprep.subr.bf16.mxu0 0
      %356 = vmatpush1.bf16.msra.mxu0 0
      %357 = vmatprep.mubr.bf16.mxu0 0
      %358 = vmatmul.mubr.bf16.gmra.mrb[0].mxu0 %v319
      %v359 = vpop.f32.mrb[0].mxu0
      %v360 = vadd.f32 0.0, %v359
      %v361 = vpop.f32.mrb[0].mxu0
      %v362 = vpop.f32.mrb[0].mxu0
      %v363 = vpop.f32.mrb[0].mxu0
      %364 = vdwg.mxu0
      %v365 = vpack.c.bf16 %v360, %v360
      %366 = vrot.lane.b32.xlu0 %v170, 16
      %v367 = vpop.permute.xlu0 %366
      %v369 = vmul.f32 %v178, %v367
      %370 = vrot.lane.b32.xlu0 %v171, 24
      %v371 = vpop.permute.xlu0 %370
      %v373 = vmul.f32 %v178, %v371
      %375 = vrot.lane.b32.xlu0 %v373, 120
      %v376 = vpop.permute.xlu0 %375
      %v378 = vadd.f32 %v369, %v376
      %379 = vrot.lane.b32.xlu0 %v170, 24
      %v380 = vpop.permute.xlu0 %379
      %v382 = vmul.f32 %v178, %v380
      %383 = vrot.lane.b32.xlu0 %v171, 16
      %v384 = vpop.permute.xlu0 %383
      %v386 = vmul.f32 %v178, %v384
      %388 = vrot.lane.b32.xlu0 %v386, 8
      %v389 = vpop.permute.xlu0 %388
      %v391 = vsub.f32 %v382, %v389
      %393 = vrot.lane.b32.xlu0 %v378, 112
      %v394 = vpop.permute.xlu0 %393
      %397 = vrot.lane.b32.xlu0 %v391, 112
      %v398 = vpop.permute.xlu0 %397
      %v400 = vsel %vm202, %v394, %v398
      %v401 = vmul.f32 %v400, %v400
      %v402 = vsel %vm205, %v401, 0.0
      %403 = vadd.xlane.f32.xlu0 %v402
      %v404 = vpop.xlane.xlu0 %403
      %v405 = vmul.f32 %v404, 0.0625
      %v406 = vadd.f32 %v405, 1.1920929e-07
      %v407 = vrsqrt.pop %v406
      %v408 = vmul.f32 %v400, %v407
      %v409 = vmul.f32 %v408, 0.25
      %v410 = vpack.c.bf16 %v409, %v409
      %411 = vrot.lane.b32.xlu0 %v170, 80
      %v412 = vpop.permute.xlu0 %411
      %v414 = vmul.f32 %v178, %v412
      %415 = vrot.lane.b32.xlu0 %v171, 88
      %v416 = vpop.permute.xlu0 %415
      %v418 = vmul.f32 %v178, %v416
      %420 = vrot.lane.b32.xlu0 %v418, 120
      %v421 = vpop.permute.xlu0 %420
      %v423 = vadd.f32 %v414, %v421
      %424 = vrot.lane.b32.xlu0 %v170, 88
      %v425 = vpop.permute.xlu0 %424
      %v427 = vmul.f32 %v178, %v425
      %428 = vrot.lane.b32.xlu0 %v171, 80
      %v429 = vpop.permute.xlu0 %428
      %v431 = vmul.f32 %v178, %v429
      %433 = vrot.lane.b32.xlu0 %v431, 8
      %v434 = vpop.permute.xlu0 %433
      %v436 = vsub.f32 %v427, %v434
      %438 = vrot.lane.b32.xlu0 %v423, 48
      %v439 = vpop.permute.xlu0 %438
      %442 = vrot.lane.b32.xlu0 %v436, 48
      %v443 = vpop.permute.xlu0 %442
      %v445 = vsel %vm202, %v439, %v443
      %v446 = vmul.f32 %v445, %v445
      %v447 = vsel %vm205, %v446, 0.0
      %448 = vadd.xlane.f32.xlu0 %v447
      %v449 = vpop.xlane.xlu0 %448
      %v450 = vmul.f32 %v449, 0.0625
      %v451 = vadd.f32 %v450, 1.1920929e-07
      %v452 = vrsqrt.pop %v451
      %v453 = vmul.f32 %v445, %v452
      %v454 = vpack.c.bf16 %v453, %v453
      %v456 = vsel %vm205, %v410, 0
      %v459 = vsel %vm205, %v454, 0
      %461 = vmatprep.subr.bf16.mxu0 0
      %462 = vmatpush1.bf16.xpose.msra.mxu0 %v459
      %463 = vmatprep.subr.bf16.mxu0 0
      %464 = vmatpush1.bf16.xpose.msra.mxu0 0
      %465 = vmatprep.subr.bf16.mxu0 0
      %466 = vmatpush1.bf16.xpose.msra.mxu0 0
      %467 = vmatprep.subr.bf16.mxu0 0
      %468 = vmatpush1.bf16.xpose.msra.mxu0 0
      %469 = vmatprep.subr.bf16.mxu0 0
      %470 = vmatpush1.bf16.xpose.msra.mxu0 0
      %471 = vmatprep.subr.bf16.mxu0 0
      %472 = vmatpush1.bf16.xpose.msra.mxu0 0
      %473 = vmatprep.subr.bf16.mxu0 0
      %474 = vmatpush1.bf16.xpose.msra.mxu0 0
      %475 = vmatprep.subr.bf16.mxu0 0
      %476 = vmatpush1.bf16.xpose.msra.mxu0 0
      %477 = vmatprep.subr.bf16.mxu0 0
      %478 = vmatpush1.bf16.xpose.msra.mxu0 0
      %479 = vmatprep.subr.bf16.mxu0 0
      %480 = vmatpush1.bf16.xpose.msra.mxu0 0
      %481 = vmatprep.subr.bf16.mxu0 0
      %482 = vmatpush1.bf16.xpose.msra.mxu0 0
      %483 = vmatprep.subr.bf16.mxu0 0
      %484 = vmatpush1.bf16.xpose.msra.mxu0 0
      %485 = vmatprep.subr.bf16.mxu0 0
      %486 = vmatpush1.bf16.xpose.msra.mxu0 0
      %487 = vmatprep.subr.bf16.mxu0 0
      %488 = vmatpush1.bf16.xpose.msra.mxu0 0
      %489 = vmatprep.subr.bf16.mxu0 0
      %490 = vmatpush1.bf16.xpose.msra.mxu0 0
      %491 = vmatprep.subr.bf16.mxu0 0
      %492 = vmatpush1.bf16.xpose.msra.mxu0 0
      %493 = vmatprep.mubr.bf16.mxu0 0
      %494 = vmatmul.mubr.bf16.gmra.mrb[0].mxu0 %v456
      %v495 = vpop.f32.mrb[0].mxu0
      %v496 = vadd.f32 0.0, %v495
      %v497 = vpop.f32.mrb[0].mxu0
      %v498 = vpop.f32.mrb[0].mxu0
      %v499 = vpop.f32.mrb[0].mxu0
      %500 = vdwg.mxu0
      %v501 = vsel %vm176, %v496, -1e+30
      %v502 = vsel %vm202, %v501, -inf
      %503 = vmax.xlane.f32.xlu0 %v502
      %v504 = vpop.xlane.xlu0 %503
      %v505 = vsub.f32 %v501, %v504
      %v506 = vmul.f32 %v505, 1.442695
      %v507 = vpow.pop %v506
      %v508 = vsel %vm202, %v507, 0.0
      %509 = vadd.xlane.f32.xlu0 %v508
      %v510 = vpop.xlane.xlu0 %509
      %v511 = vrcp.pop %v510
      %v512 = vmul.f32 %v507, %v511
      %v513 = vpack.c.bf16 %v512, %v512
      %v515 = vunpack.c.l.b16 %v179
      %v516 = vpack.c.b16 %v515, %v515
      %517 = vrot.lane.b32.xlu0 %v516, 112
      %v518 = vpop.permute.xlu0 %517
      %v520 = vsel %vm202, %v513, 0
      %v523 = vsel %vm321, %v518, 0
      %525 = vmatprep.subr.bf16.mxu0 0
      %526 = vmatpush1.bf16.msra.mxu0 %v523
      %527 = vmatprep.subr.bf16.mxu0 0
      %528 = vmatpush1.bf16.msra.mxu0 0
      %529 = vmatprep.subr.bf16.mxu0 0
      %530 = vmatpush1.bf16.msra.mxu0 0
      %531 = vmatprep.subr.bf16.mxu0 0
      %532 = vmatpush1.bf16.msra.mxu0 0
      %533 = vmatprep.subr.bf16.mxu0 0
      %534 = vmatpush1.bf16.msra.mxu0 0
      %535 = vmatprep.subr.bf16.mxu0 0
      %536 = vmatpush1.bf16.msra.mxu0 0
      %537 = vmatprep.subr.bf16.mxu0 0
      %538 = vmatpush1.bf16.msra.mxu0 0
      %539 = vmatprep.subr.bf16.mxu0 0
      %540 = vmatpush1.bf16.msra.mxu0 0
      %541 = vmatprep.subr.bf16.mxu0 0
      %542 = vmatpush1.bf16.msra.mxu0 0
      %543 = vmatprep.subr.bf16.mxu0 0
      %544 = vmatpush1.bf16.msra.mxu0 0
      %545 = vmatprep.subr.bf16.mxu0 0
      %546 = vmatpush1.bf16.msra.mxu0 0
      %547 = vmatprep.subr.bf16.mxu0 0
      %548 = vmatpush1.bf16.msra.mxu0 0
      %549 = vmatprep.subr.bf16.mxu0 0
      %550 = vmatpush1.bf16.msra.mxu0 0
      %551 = vmatprep.subr.bf16.mxu0 0
      %552 = vmatpush1.bf16.msra.mxu0 0
      %553 = vmatprep.subr.bf16.mxu0 0
      %554 = vmatpush1.bf16.msra.mxu0 0
      %555 = vmatprep.subr.bf16.mxu0 0
      %556 = vmatpush1.bf16.msra.mxu0 0
      %557 = vmatprep.mubr.bf16.mxu0 0
      %558 = vmatmul.mubr.bf16.gmra.mrb[0].mxu0 %v520
      %v559 = vpop.f32.mrb[0].mxu0
      %v560 = vadd.f32 0.0, %v559
      %v561 = vpop.f32.mrb[0].mxu0
      %v562 = vpop.f32.mrb[0].mxu0
      %v563 = vpop.f32.mrb[0].mxu0
      %564 = vdwg.mxu0
      %v565 = vpack.c.bf16 %v560, %v560
      %566 = vrot.lane.b32.xlu0 %v170, 32
      %v567 = vpop.permute.xlu0 %566
      %v569 = vmul.f32 %v178, %v567
      %570 = vrot.lane.b32.xlu0 %v171, 40
      %v571 = vpop.permute.xlu0 %570
      %v573 = vmul.f32 %v178, %v571
      %575 = vrot.lane.b32.xlu0 %v573, 120
      %v576 = vpop.permute.xlu0 %575
      %v578 = vadd.f32 %v569, %v576
      %579 = vrot.lane.b32.xlu0 %v170, 40
      %v580 = vpop.permute.xlu0 %579
      %v582 = vmul.f32 %v178, %v580
      %583 = vrot.lane.b32.xlu0 %v171, 32
      %v584 = vpop.permute.xlu0 %583
      %v586 = vmul.f32 %v178, %v584
      %588 = vrot.lane.b32.xlu0 %v586, 8
      %v589 = vpop.permute.xlu0 %588
      %v591 = vsub.f32 %v582, %v589
      %593 = vrot.lane.b32.xlu0 %v578, 96
      %v594 = vpop.permute.xlu0 %593
      %597 = vrot.lane.b32.xlu0 %v591, 96
      %v598 = vpop.permute.xlu0 %597
      %v600 = vsel %vm202, %v594, %v598
      %v601 = vmul.f32 %v600, %v600
      %v602 = vsel %vm205, %v601, 0.0
      %603 = vadd.xlane.f32.xlu0 %v602
      %v604 = vpop.xlane.xlu0 %603
      %v605 = vmul.f32 %v604, 0.0625
      %v606 = vadd.f32 %v605, 1.1920929e-07
      %v607 = vrsqrt.pop %v606
      %v608 = vmul.f32 %v600, %v607
      %v609 = vmul.f32 %v608, 0.25
      %v610 = vpack.c.bf16 %v609, %v609
      %611 = vrot.lane.b32.xlu0 %v170, 96
      %v612 = vpop.permute.xlu0 %611
      %v614 = vmul.f32 %v178, %v612
      %615 = vrot.lane.b32.xlu0 %v171, 104
      %v616 = vpop.permute.xlu0 %615
      %v618 = vmul.f32 %v178, %v616
      %620 = vrot.lane.b32.xlu0 %v618, 120
      %v621 = vpop.permute.xlu0 %620
      %v623 = vadd.f32 %v614, %v621
      %624 = vrot.lane.b32.xlu0 %v170, 104
      %v625 = vpop.permute.xlu0 %624
      %v627 = vmul.f32 %v178, %v625
      %628 = vrot.lane.b32.xlu0 %v171, 96
      %v629 = vpop.permute.xlu0 %628
      %v631 = vmul.f32 %v178, %v629
      %633 = vrot.lane.b32.xlu0 %v631, 8
      %v634 = vpop.permute.xlu0 %633
      %v636 = vsub.f32 %v627, %v634
      %638 = vrot.lane.b32.xlu0 %v623, 32
      %v639 = vpop.permute.xlu0 %638
      %642 = vrot.lane.b32.xlu0 %v636, 32
      %v643 = vpop.permute.xlu0 %642
      %v645 = vsel %vm202, %v639, %v643
      %v646 = vmul.f32 %v645, %v645
      %v647 = vsel %vm205, %v646, 0.0
      %648 = vadd.xlane.f32.xlu0 %v647
      %v649 = vpop.xlane.xlu0 %648
      %v650 = vmul.f32 %v649, 0.0625
      %v651 = vadd.f32 %v650, 1.1920929e-07
      %v652 = vrsqrt.pop %v651
      %v653 = vmul.f32 %v645, %v652
      %v654 = vpack.c.bf16 %v653, %v653
      %v656 = vsel %vm205, %v610, 0
      %v659 = vsel %vm205, %v654, 0
      %661 = vmatprep.subr.bf16.mxu0 0
      %662 = vmatpush1.bf16.xpose.msra.mxu0 %v659
      %663 = vmatprep.subr.bf16.mxu0 0
      %664 = vmatpush1.bf16.xpose.msra.mxu0 0
      %665 = vmatprep.subr.bf16.mxu0 0
      %666 = vmatpush1.bf16.xpose.msra.mxu0 0
      %667 = vmatprep.subr.bf16.mxu0 0
      %668 = vmatpush1.bf16.xpose.msra.mxu0 0
      %669 = vmatprep.subr.bf16.mxu0 0
      %670 = vmatpush1.bf16.xpose.msra.mxu0 0
      %671 = vmatprep.subr.bf16.mxu0 0
      %672 = vmatpush1.bf16.xpose.msra.mxu0 0
      %673 = vmatprep.subr.bf16.mxu0 0
      %674 = vmatpush1.bf16.xpose.msra.mxu0 0
      %675 = vmatprep.subr.bf16.mxu0 0
      %676 = vmatpush1.bf16.xpose.msra.mxu0 0
      %677 = vmatprep.subr.bf16.mxu0 0
      %678 = vmatpush1.bf16.xpose.msra.mxu0 0
      %679 = vmatprep.subr.bf16.mxu0 0
      %680 = vmatpush1.bf16.xpose.msra.mxu0 0
      %681 = vmatprep.subr.bf16.mxu0 0
      %682 = vmatpush1.bf16.xpose.msra.mxu0 0
      %683 = vmatprep.subr.bf16.mxu0 0
      %684 = vmatpush1.bf16.xpose.msra.mxu0 0
      %685 = vmatprep.subr.bf16.mxu0 0
      %686 = vmatpush1.bf16.xpose.msra.mxu0 0
      %687 = vmatprep.subr.bf16.mxu0 0
      %688 = vmatpush1.bf16.xpose.msra.mxu0 0
      %689 = vmatprep.subr.bf16.mxu0 0
      %690 = vmatpush1.bf16.xpose.msra.mxu0 0
      %691 = vmatprep.subr.bf16.mxu0 0
      %692 = vmatpush1.bf16.xpose.msra.mxu0 0
      %693 = vmatprep.mubr.bf16.mxu0 0
      %694 = vmatmul.mubr.bf16.gmra.mrb[0].mxu0 %v656
      %v695 = vpop.f32.mrb[0].mxu0
      %v696 = vadd.f32 0.0, %v695
      %v697 = vpop.f32.mrb[0].mxu0
      %v698 = vpop.f32.mrb[0].mxu0
      %v699 = vpop.f32.mrb[0].mxu0
      %700 = vdwg.mxu0
      %v701 = vsel %vm176, %v696, -1e+30
      %v702 = vsel %vm202, %v701, -inf
      %703 = vmax.xlane.f32.xlu0 %v702
      %v704 = vpop.xlane.xlu0 %703
      %v705 = vsub.f32 %v701, %v704
      %v706 = vmul.f32 %v705, 1.442695
      %v707 = vpow.pop %v706
      %v708 = vsel %vm202, %v707, 0.0
      %709 = vadd.xlane.f32.xlu0 %v708
      %v710 = vpop.xlane.xlu0 %709
      %v711 = vrcp.pop %v710
      %v712 = vmul.f32 %v707, %v711
      %v713 = vpack.c.bf16 %v712, %v712
      %714 = vrot.lane.b32.xlu0 %v516, 96
      %v715 = vpop.permute.xlu0 %714
      %v717 = vsel %vm202, %v713, 0
      %v720 = vsel %vm321, %v715, 0
      %722 = vmatprep.subr.bf16.mxu0 0
      %723 = vmatpush1.bf16.msra.mxu0 %v720
      %724 = vmatprep.subr.bf16.mxu0 0
      %725 = vmatpush1.bf16.msra.mxu0 0
      %726 = vmatprep.subr.bf16.mxu0 0
      %727 = vmatpush1.bf16.msra.mxu0 0
      %728 = vmatprep.subr.bf16.mxu0 0
      %729 = vmatpush1.bf16.msra.mxu0 0
      %730 = vmatprep.subr.bf16.mxu0 0
      %731 = vmatpush1.bf16.msra.mxu0 0
      %732 = vmatprep.subr.bf16.mxu0 0
      %733 = vmatpush1.bf16.msra.mxu0 0
      %734 = vmatprep.subr.bf16.mxu0 0
      %735 = vmatpush1.bf16.msra.mxu0 0
      %736 = vmatprep.subr.bf16.mxu0 0
      %737 = vmatpush1.bf16.msra.mxu0 0
      %738 = vmatprep.subr.bf16.mxu0 0
      %739 = vmatpush1.bf16.msra.mxu0 0
      %740 = vmatprep.subr.bf16.mxu0 0
      %741 = vmatpush1.bf16.msra.mxu0 0
      %742 = vmatprep.subr.bf16.mxu0 0
      %743 = vmatpush1.bf16.msra.mxu0 0
      %744 = vmatprep.subr.bf16.mxu0 0
      %745 = vmatpush1.bf16.msra.mxu0 0
      %746 = vmatprep.subr.bf16.mxu0 0
      %747 = vmatpush1.bf16.msra.mxu0 0
      %748 = vmatprep.subr.bf16.mxu0 0
      %749 = vmatpush1.bf16.msra.mxu0 0
      %750 = vmatprep.subr.bf16.mxu0 0
      %751 = vmatpush1.bf16.msra.mxu0 0
      %752 = vmatprep.subr.bf16.mxu0 0
      %753 = vmatpush1.bf16.msra.mxu0 0
      %754 = vmatprep.mubr.bf16.mxu0 0
      %755 = vmatmul.mubr.bf16.gmra.mrb[0].mxu0 %v717
      %v756 = vpop.f32.mrb[0].mxu0
      %v757 = vadd.f32 0.0, %v756
      %v758 = vpop.f32.mrb[0].mxu0
      %v759 = vpop.f32.mrb[0].mxu0
      %v760 = vpop.f32.mrb[0].mxu0
      %761 = vdwg.mxu0
      %v762 = vpack.c.bf16 %v757, %v757
      %763 = vrot.lane.b32.xlu0 %v170, 48
      %v764 = vpop.permute.xlu0 %763
      %v766 = vmul.f32 %v178, %v764
      %767 = vrot.lane.b32.xlu0 %v171, 56
      %v768 = vpop.permute.xlu0 %767
      %v770 = vmul.f32 %v178, %v768
      %772 = vrot.lane.b32.xlu0 %v770, 120
      %v773 = vpop.permute.xlu0 %772
      %v775 = vadd.f32 %v766, %v773
      %776 = vrot.lane.b32.xlu0 %v170, 56
      %v777 = vpop.permute.xlu0 %776
      %v779 = vmul.f32 %v178, %v777
      %780 = vrot.lane.b32.xlu0 %v171, 48
      %v781 = vpop.permute.xlu0 %780
      %v783 = vmul.f32 %v178, %v781
      %785 = vrot.lane.b32.xlu0 %v783, 8
      %v786 = vpop.permute.xlu0 %785
      %v788 = vsub.f32 %v779, %v786
      %790 = vrot.lane.b32.xlu0 %v775, 80
      %v791 = vpop.permute.xlu0 %790
      %794 = vrot.lane.b32.xlu0 %v788, 80
      %v795 = vpop.permute.xlu0 %794
      %v797 = vsel %vm202, %v791, %v795
      %v798 = vmul.f32 %v797, %v797
      %v799 = vsel %vm205, %v798, 0.0
      %800 = vadd.xlane.f32.xlu0 %v799
      %v801 = vpop.xlane.xlu0 %800
      %v802 = vmul.f32 %v801, 0.0625
      %v803 = vadd.f32 %v802, 1.1920929e-07
      %v804 = vrsqrt.pop %v803
      %v805 = vmul.f32 %v797, %v804
      %v806 = vmul.f32 %v805, 0.25
      %v807 = vpack.c.bf16 %v806, %v806
      %808 = vrot.lane.b32.xlu0 %v170, 112
      %v809 = vpop.permute.xlu0 %808
      %v811 = vmul.f32 %v178, %v809
      %812 = vrot.lane.b32.xlu0 %v171, 120
      %v813 = vpop.permute.xlu0 %812
      %v815 = vmul.f32 %v178, %v813
      %817 = vrot.lane.b32.xlu0 %v815, 120
      %v818 = vpop.permute.xlu0 %817
      %v820 = vadd.f32 %v811, %v818
      %821 = vrot.lane.b32.xlu0 %v170, 120
      %v822 = vpop.permute.xlu0 %821
      %v824 = vmul.f32 %v178, %v822
      %825 = vrot.lane.b32.xlu0 %v171, 112
      %v826 = vpop.permute.xlu0 %825
      %v828 = vmul.f32 %v178, %v826
      %830 = vrot.lane.b32.xlu0 %v828, 8
      %v831 = vpop.permute.xlu0 %830
      %v833 = vsub.f32 %v824, %v831
      %835 = vrot.lane.b32.xlu0 %v820, 16
      %v836 = vpop.permute.xlu0 %835
      %839 = vrot.lane.b32.xlu0 %v833, 16
      %v840 = vpop.permute.xlu0 %839
      %v842 = vsel %vm202, %v836, %v840
      %v843 = vmul.f32 %v842, %v842
      %v844 = vsel %vm205, %v843, 0.0
      %845 = vadd.xlane.f32.xlu0 %v844
      %v846 = vpop.xlane.xlu0 %845
      %v847 = vmul.f32 %v846, 0.0625
      %v848 = vadd.f32 %v847, 1.1920929e-07
      %v849 = vrsqrt.pop %v848
      %v850 = vmul.f32 %v842, %v849
      %v851 = vpack.c.bf16 %v850, %v850
      %v853 = vsel %vm205, %v807, 0
      %v856 = vsel %vm205, %v851, 0
      %858 = vmatprep.subr.bf16.mxu0 0
      %859 = vmatpush1.bf16.xpose.msra.mxu0 %v856
      %860 = vmatprep.subr.bf16.mxu0 0
      %861 = vmatpush1.bf16.xpose.msra.mxu0 0
      %862 = vmatprep.subr.bf16.mxu0 0
      %863 = vmatpush1.bf16.xpose.msra.mxu0 0
      %864 = vmatprep.subr.bf16.mxu0 0
      %865 = vmatpush1.bf16.xpose.msra.mxu0 0
      %866 = vmatprep.subr.bf16.mxu0 0
      %867 = vmatpush1.bf16.xpose.msra.mxu0 0
      %868 = vmatprep.subr.bf16.mxu0 0
      %869 = vmatpush1.bf16.xpose.msra.mxu0 0
      %870 = vmatprep.subr.bf16.mxu0 0
      %871 = vmatpush1.bf16.xpose.msra.mxu0 0
      %872 = vmatprep.subr.bf16.mxu0 0
      %873 = vmatpush1.bf16.xpose.msra.mxu0 0
      %874 = vmatprep.subr.bf16.mxu0 0
      %875 = vmatpush1.bf16.xpose.msra.mxu0 0
      %876 = vmatprep.subr.bf16.mxu0 0
      %877 = vmatpush1.bf16.xpose.msra.mxu0 0
      %878 = vmatprep.subr.bf16.mxu0 0
      %879 = vmatpush1.bf16.xpose.msra.mxu0 0
      %880 = vmatprep.subr.bf16.mxu0 0
      %881 = vmatpush1.bf16.xpose.msra.mxu0 0
      %882 = vmatprep.subr.bf16.mxu0 0
      %883 = vmatpush1.bf16.xpose.msra.mxu0 0
      %884 = vmatprep.subr.bf16.mxu0 0
      %885 = vmatpush1.bf16.xpose.msra.mxu0 0
      %886 = vmatprep.subr.bf16.mxu0 0
      %887 = vmatpush1.bf16.xpose.msra.mxu0 0
      %888 = vmatprep.subr.bf16.mxu0 0
      %889 = vmatpush1.bf16.xpose.msra.mxu0 0
      %890 = vmatprep.mubr.bf16.mxu0 0
      %891 = vmatmul.mubr.bf16.gmra.mrb[0].mxu0 %v853
      %v892 = vpop.f32.mrb[0].mxu0
      %v893 = vadd.f32 0.0, %v892
      %v894 = vpop.f32.mrb[0].mxu0
      %v895 = vpop.f32.mrb[0].mxu0
      %v896 = vpop.f32.mrb[0].mxu0
      %897 = vdwg.mxu0
      %v898 = vsel %vm176, %v893, -1e+30
      %v899 = vsel %vm202, %v898, -inf
      %900 = vmax.xlane.f32.xlu0 %v899
      %v901 = vpop.xlane.xlu0 %900
      %v902 = vsub.f32 %v898, %v901
      %v903 = vmul.f32 %v902, 1.442695
      %v904 = vpow.pop %v903
      %v905 = vsel %vm202, %v904, 0.0
      %906 = vadd.xlane.f32.xlu0 %v905
      %v907 = vpop.xlane.xlu0 %906
      %v908 = vrcp.pop %v907
      %v909 = vmul.f32 %v904, %v908
      %v910 = vpack.c.bf16 %v909, %v909
      %911 = vrot.lane.b32.xlu0 %v516, 80
      %v912 = vpop.permute.xlu0 %911
      %v914 = vsel %vm202, %v910, 0
      %v917 = vsel %vm321, %v912, 0
      %919 = vmatprep.subr.bf16.mxu0 0
      %920 = vmatpush1.bf16.msra.mxu0 %v917
      %921 = vmatprep.subr.bf16.mxu0 0
      %922 = vmatpush1.bf16.msra.mxu0 0
      %923 = vmatprep.subr.bf16.mxu0 0
      %924 = vmatpush1.bf16.msra.mxu0 0
      %925 = vmatprep.subr.bf16.mxu0 0
      %926 = vmatpush1.bf16.msra.mxu0 0
      %927 = vmatprep.subr.bf16.mxu0 0
      %928 = vmatpush1.bf16.msra.mxu0 0
      %929 = vmatprep.subr.bf16.mxu0 0
      %930 = vmatpush1.bf16.msra.mxu0 0
      %931 = vmatprep.subr.bf16.mxu0 0
      %932 = vmatpush1.bf16.msra.mxu0 0
      %933 = vmatprep.subr.bf16.mxu0 0
      %934 = vmatpush1.bf16.msra.mxu0 0
      %935 = vmatprep.subr.bf16.mxu0 0
      %936 = vmatpush1.bf16.msra.mxu0 0
      %937 = vmatprep.subr.bf16.mxu0 0
      %938 = vmatpush1.bf16.msra.mxu0 0
      %939 = vmatprep.subr.bf16.mxu0 0
      %940 = vmatpush1.bf16.msra.mxu0 0
      %941 = vmatprep.subr.bf16.mxu0 0
      %942 = vmatpush1.bf16.msra.mxu0 0
      %943 = vmatprep.subr.bf16.mxu0 0
      %944 = vmatpush1.bf16.msra.mxu0 0
      %945 = vmatprep.subr.bf16.mxu0 0
      %946 = vmatpush1.bf16.msra.mxu0 0
      %947 = vmatprep.subr.bf16.mxu0 0
      %948 = vmatpush1.bf16.msra.mxu0 0
      %949 = vmatprep.subr.bf16.mxu0 0
      %950 = vmatpush1.bf16.msra.mxu0 0
      %951 = vmatprep.mubr.bf16.mxu0 0
      %952 = vmatmul.mubr.bf16.gmra.mrb[0].mxu0 %v914
      %v953 = vpop.f32.mrb[0].mxu0
      %v954 = vadd.f32 0.0, %v953
      %v955 = vpop.f32.mrb[0].mxu0
      %v956 = vpop.f32.mrb[0].mxu0
      %v957 = vpop.f32.mrb[0].mxu0
      %958 = vdwg.mxu0
      %v959 = vpack.c.bf16 %v954, %v954
      %961 = vrot.lane.b32.xlu0 %v565, 16
      %v962 = vpop.permute.xlu0 %961
      %964 = vrot.lane.b32.xlu0 %v762, 32
      %v965 = vpop.permute.xlu0 %964
      %967 = vrot.lane.b32.xlu0 %v959, 48
      %v968 = vpop.permute.xlu0 %967
      %v971 = vsel %vm205, %v365, %v962
      %vm972 = vcmask 261120
      %v974 = vsel %vm972, %v971, %v965
      %vm975 = vcmask 392192
      %v977 = vsel %vm975, %v974, %v968
      %vm979 = vcmask 519168
      %980 = vst.msk [vmem:[%s168] sm:$0xf] %vm979, %v977
      %p981 = scmp.lt.s32.totalorder %s14, 1
      %s982 = scalar_select %p981, %s14, 1
      %s983 = smul.addr %s982, 4
      %s984 = scalar_lea.vmem %s3, %s983
      // Predicated region
      $region33: #{gpt_forward.10} parent=31 // pred_check
        %p985 = pneg %p100
      $region34: #{gpt_forward.10} parent=31 // pred_check_branch
        %987 = sbr.rel (%p985) target = $region36
      $region35: #{gpt_forward.10} parent=31 // pred_region
        _
      $region36: #{gpt_forward.10} parent=31 // pred_fallthru
        _
    $region32: #{gpt_forward.10} parent=5 // pred_fallthru
      _
    %p988 = scmp.le.s32.totalorder 2, %s9
    // Predicated region
    $region37: #{gpt_forward.10} parent=5 // pred_check
      %p989 = pneg %p988
    $region38: #{gpt_forward.10} parent=5 // pred_check_branch
      %991 = sbr.rel (%p989) target = $region40
    $region39: #{gpt_forward.10} parent=5 // pred_region
      %s992 = ssub.s32 %s9, 2
      // Predicated region
      $region41: #{gpt_forward.10} parent=39 // pred_check
        %p993 = pneg %p106
      $region42: #{gpt_forward.10} parent=39 // pred_check_branch
        %995 = sbr.rel (%p993) target = $region44
      $region43: #{gpt_forward.10} parent=39 // pred_region
        %p996 = scmp.lt.s32.totalorder %s15, 1
        %s997 = scalar_select %p996, %s15, 1
        %s998 = smul.addr %s997, 4
        %s999 = scalar_lea.vmem %s3, %s998
      $region44: #{gpt_forward.10} parent=39 // pred_fallthru
        _
    $region40: #{gpt_forward.10} parent=5 // pred_fallthru
      _
  $region6: #{gpt_forward.10} parent=0 // loop_footer
    %s13 = sadd.s32 1, %s9
  $region7: #{gpt_forward.10} parent=0 // loop_footer_branch
    %8 = sbr.rel target = $region3
  $region8: #{gpt_forward.10} parent=0 // loop_exit
    _

// kernel: gpt_forward.12
$region0: #{gpt_forward.12}
  #allocation0 [shape = 'u32[]', space=smem, size = 0x4, offset = 0x4, fixed_abs, tag = 'smem constant byte address 0x4 - core index']
  #allocation1 [shape = 'u32[144,128]{1,0:T(1,128)}', space=vmem, size = 0x12000, scoped, tag = 'internal scratch']
  %s0 = inlined_call_operand.vmem [shape: f32[16,64], index: 0, kind: input, shape index: {}]
  %s1 = inlined_call_operand.vmem [shape: bf16[64,256], index: 1, kind: input, shape index: {}]
  %s2 = inlined_call_operand.vmem [shape: bf16[256,64], index: 2, kind: input, shape index: {}]
  %s3 = inlined_call_operand.vmem [shape: f32[16,64], index: 3, kind: output, shape index: {}]
  %s4 = sld [smem:[#allocation0]]
  $region22: #{gpt_forward.12} parent=0
    _
  %s6 = ssub.s32 1, %s4
  %s7 = scalar_select 0, %s6, %s4
  // Predicated region
  $region2: #{gpt_forward.12} parent=0 // pred_check
    _
  $region3: #{gpt_forward.12} parent=0 // pred_check_branch
    %9 = sbr.rel (0) target = $region5
  $region4: #{gpt_forward.12} parent=0 // pred_region
    _
  $region5: #{gpt_forward.12} parent=0 // pred_fallthru
    _
  // Predicated region
  $region6: #{gpt_forward.12} parent=0 // pred_check
    _
  $region7: #{gpt_forward.12} parent=0 // pred_check_branch
    %11 = sbr.rel (0) target = $region9
  $region8: #{gpt_forward.12} parent=0 // pred_region
    _
  $region9: #{gpt_forward.12} parent=0 // pred_fallthru
    _
  // Predicated region
  $region10: #{gpt_forward.12} parent=0 // pred_check
    _
  $region11: #{gpt_forward.12} parent=0 // pred_check_branch
    %13 = sbr.rel (0) target = $region13
  $region12: #{gpt_forward.12} parent=0 // pred_region
    _
  $region13: #{gpt_forward.12} parent=0 // pred_fallthru
    _
  %v15 = vld [vmem:[%s0] sm:$0xff]
  %v16 = vld [vmem:[%s0 + $0x8] sm:$0xff]
  %v17 = vmul.f32 %v15, %v15
  %v18 = vmul.f32 %v16, %v16
  %vm19 = vcmask 523264
  %v20 = vsel %vm19, %v17, 0.0
  %21 = vadd.xlane.f32.xlu0 %v20
  %v22 = vpop.xlane.xlu0 %21
  %v23 = vsel %vm19, %v18, 0.0
  %24 = vadd.xlane.f32.xlu0 %v23
  %v25 = vpop.xlane.xlu0 %24
  %v26 = vmul.f32 %v22, 0.015625
  %v27 = vmul.f32 %v25, 0.015625
  %v28 = vadd.f32 %v26, 1.1920929e-07
  %v29 = vadd.f32 %v27, 1.1920929e-07
  %v30 = vrsqrt.pop %v28
  %v31 = vrsqrt.pop %v29
  %v32 = vmul.f32 %v15, %v30
  %v33 = vmul.f32 %v16, %v31
  %v34 = vpack.c.bf16 %v33, %v32
  %v35 = vld [vmem:[%s1] sm:$0xff]
  %v36 = vld [vmem:[%s1 + $0x8] sm:$0xff]
  %v37 = vld [vmem:[%s1 + $0x10] sm:$0xff]
  %v38 = vld [vmem:[%s1 + $0x18] sm:$0xff]
  %v39 = vld [vmem:[%s1 + $0x20] sm:$0xff]
  %v40 = vld [vmem:[%s1 + $0x28] sm:$0xff]
  %v41 = vld [vmem:[%s1 + $0x30] sm:$0xff]
  %v42 = vld [vmem:[%s1 + $0x38] sm:$0xff]
  %v51 = vunpack.c.l.b16 %v35
  %v52 = vunpack.c.h.b16 %v35
  %v53 = vunpack.c.l.b16 %v36
  %v54 = vunpack.c.h.b16 %v36
  %v55 = vunpack.c.l.b16 %v37
  %v56 = vunpack.c.h.b16 %v37
  %v57 = vunpack.c.l.b16 %v38
  %v58 = vunpack.c.h.b16 %v38
  %v59 = vunpack.c.l.b16 %v39
  %v60 = vunpack.c.h.b16 %v39
  %v61 = vunpack.c.l.b16 %v40
  %v62 = vunpack.c.h.b16 %v40
  %v63 = vunpack.c.l.b16 %v41
  %v64 = vunpack.c.h.b16 %v41
  %v65 = vunpack.c.l.b16 %v42
  %v66 = vunpack.c.h.b16 %v42
  %v67 = vpack.c.b16 %v53, %v51
  %v68 = vpack.c.b16 %v54, %v52
  %v69 = vpack.c.b16 %v57, %v55
  %v70 = vpack.c.b16 %v58, %v56
  %v71 = vpack.c.b16 %v61, %v59
  %v72 = vpack.c.b16 %v62, %v60
  %v73 = vpack.c.b16 %v65, %v63
  %v74 = vpack.c.b16 %v66, %v64
  %v84 = vsel %vm19, %v34, 0
  %86 = vmatprep.subr.bf16.mxu0 %v68
  %87 = vmatpush1.bf16.msra.mxu0 %v67
  %88 = vmatprep.subr.bf16.mxu0 %v70
  %89 = vmatpush1.bf16.msra.mxu0 %v69
  %90 = vmatprep.subr.bf16.mxu0 %v72
  %91 = vmatpush1.bf16.msra.mxu0 %v71
  %92 = vmatprep.subr.bf16.mxu0 %v74
  %93 = vmatpush1.bf16.msra.mxu0 %v73
  %94 = vmatprep.subr.bf16.mxu0 0
  %95 = vmatpush1.bf16.msra.mxu0 0
  %96 = vmatprep.subr.bf16.mxu0 0
  %97 = vmatpush1.bf16.msra.mxu0 0
  %98 = vmatprep.subr.bf16.mxu0 0
  %99 = vmatpush1.bf16.msra.mxu0 0
  %100 = vmatprep.subr.bf16.mxu0 0
  %101 = vmatpush1.bf16.msra.mxu0 0
  %102 = vmatprep.subr.bf16.mxu0 0
  %103 = vmatpush1.bf16.msra.mxu0 0
  %104 = vmatprep.subr.bf16.mxu0 0
  %105 = vmatpush1.bf16.msra.mxu0 0
  %106 = vmatprep.subr.bf16.mxu0 0
  %107 = vmatpush1.bf16.msra.mxu0 0
  %108 = vmatprep.subr.bf16.mxu0 0
  %109 = vmatpush1.bf16.msra.mxu0 0
  %110 = vmatprep.subr.bf16.mxu0 0
  %111 = vmatpush1.bf16.msra.mxu0 0
  %112 = vmatprep.subr.bf16.mxu0 0
  %113 = vmatpush1.bf16.msra.mxu0 0
  %114 = vmatprep.subr.bf16.mxu0 0
  %115 = vmatpush1.bf16.msra.mxu0 0
  %116 = vmatprep.subr.bf16.mxu0 0
  %117 = vmatpush1.bf16.msra.mxu0 0
  %118 = vmatprep.mubr.bf16.mxu0 0
  %119 = vmatmul.mubr.bf16.gmra.mrb[0].mxu0 %v84
  %v120 = vpop.f32.mrb[0].mxu0
  %v121 = vadd.f32 0.0, %v120
  %v122 = vpop.f32.mrb[0].mxu0
  %v123 = vadd.f32 0.0, %v122
  %v124 = vpop.f32.mrb[0].mxu0
  %v125 = vadd.f32 0.0, %v124
  %v126 = vpop.f32.mrb[0].mxu0
  %v127 = vadd.f32 0.0, %v126
  %128 = vdwg.mxu0
  %v129 = vmax.f32 %v121, 0.0
  %v130 = vmax.f32 %v123, 0.0
  %v131 = vmax.f32 %v125, 0.0
  %v132 = vmax.f32 %v127, 0.0
  %v133 = vmul.f32 %v129, %v129
  %v134 = vmul.f32 %v130, %v130
  %v135 = vmul.f32 %v131, %v131
  %v136 = vmul.f32 %v132, %v132
  %v137 = vpack.c.bf16 %v135, %v133
  %v138 = vpack.c.bf16 %v136, %v134
  %v139 = vld [vmem:[%s2] sm:$0xf]
  %v140 = vld [vmem:[%s2 + $0x4] sm:$0xf]
  %v141 = vld [vmem:[%s2 + $0x8] sm:$0xf]
  %v142 = vld [vmem:[%s2 + $0xc] sm:$0xf]
  %v143 = vld [vmem:[%s2 + $0x10] sm:$0xf]
  %v144 = vld [vmem:[%s2 + $0x14] sm:$0xf]
  %v145 = vld [vmem:[%s2 + $0x18] sm:$0xf]
  %v146 = vld [vmem:[%s2 + $0x1c] sm:$0xf]
  %v147 = vld [vmem:[%s2 + $0x20] sm:$0xf]
  %v148 = vld [vmem:[%s2 + $0x24] sm:$0xf]
  %v149 = vld [vmem:[%s2 + $0x28] sm:$0xf]
  %v150 = vld [vmem:[%s2 + $0x2c] sm:$0xf]
  %v151 = vld [vmem:[%s2 + $0x30] sm:$0xf]
  %v152 = vld [vmem:[%s2 + $0x34] sm:$0xf]
  %v153 = vld [vmem:[%s2 + $0x38] sm:$0xf]
  %v154 = vld [vmem:[%s2 + $0x3c] sm:$0xf]
  %v155 = vld [vmem:[%s2 + $0x40] sm:$0xf]
  %v156 = vld [vmem:[%s2 + $0x44] sm:$0xf]
  %v157 = vld [vmem:[%s2 + $0x48] sm:$0xf]
  %v158 = vld [vmem:[%s2 + $0x4c] sm:$0xf]
  %v159 = vld [vmem:[%s2 + $0x50] sm:$0xf]
  %v160 = vld [vmem:[%s2 + $0x54] sm:$0xf]
  %v161 = vld [vmem:[%s2 + $0x58] sm:$0xf]
  %v162 = vld [vmem:[%s2 + $0x5c] sm:$0xf]
  %v163 = vld [vmem:[%s2 + $0x60] sm:$0xf]
  %v164 = vld [vmem:[%s2 + $0x64] sm:$0xf]
  %v165 = vld [vmem:[%s2 + $0x68] sm:$0xf]
  %v166 = vld [vmem:[%s2 + $0x6c] sm:$0xf]
  %v167 = vld [vmem:[%s2 + $0x70] sm:$0xf]
  %v168 = vld [vmem:[%s2 + $0x74] sm:$0xf]
  %v169 = vld [vmem:[%s2 + $0x78] sm:$0xf]
  %v170 = vld [vmem:[%s2 + $0x7c] sm:$0xf]
  %v203 = vunpack.c.l.b16 %v139
  %v204 = vunpack.c.l.b16 %v140
  %v205 = vunpack.c.l.b16 %v141
  %v206 = vunpack.c.l.b16 %v142
  %v207 = vunpack.c.l.b16 %v143
  %v208 = vunpack.c.l.b16 %v144
  %v209 = vunpack.c.l.b16 %v145
  %v210 = vunpack.c.l.b16 %v146
  %v211 = vunpack.c.l.b16 %v147
  %v212 = vunpack.c.l.b16 %v148
  %v213 = vunpack.c.l.b16 %v149
  %v214 = vunpack.c.l.b16 %v150
  %v215 = vunpack.c.l.b16 %v151
  %v216 = vunpack.c.l.b16 %v152
  %v217 = vunpack.c.l.b16 %v153
  %v218 = vunpack.c.l.b16 %v154
  %v219 = vunpack.c.l.b16 %v155
  %v220 = vunpack.c.l.b16 %v156
  %v221 = vunpack.c.l.b16 %v157
  %v222 = vunpack.c.l.b16 %v158
  %v223 = vunpack.c.l.b16 %v159
  %v224 = vunpack.c.l.b16 %v160
  %v225 = vunpack.c.l.b16 %v161
  %v226 = vunpack.c.l.b16 %v162
  %v227 = vunpack.c.l.b16 %v163
  %v228 = vunpack.c.l.b16 %v164
  %v229 = vunpack.c.l.b16 %v165
  %v230 = vunpack.c.l.b16 %v166
  %v231 = vunpack.c.l.b16 %v167
  %v232 = vunpack.c.l.b16 %v168
  %v233 = vunpack.c.l.b16 %v169
  %v234 = vunpack.c.l.b16 %v170
  %v235 = vpack.c.b16 %v204, %v203
  %v236 = vpack.c.b16 %v206, %v205
  %v237 = vpack.c.b16 %v208, %v207
  %v238 = vpack.c.b16 %v210, %v209
  %v239 = vpack.c.b16 %v212, %v211
  %v240 = vpack.c.b16 %v214, %v213
  %v241 = vpack.c.b16 %v216, %v215
  %v242 = vpack.c.b16 %v218, %v217
  %v243 = vpack.c.b16 %v220, %v219
  %v244 = vpack.c.b16 %v222, %v221
  %v245 = vpack.c.b16 %v224, %v223
  %v246 = vpack.c.b16 %v226, %v225
  %v247 = vpack.c.b16 %v228, %v227
  %v248 = vpack.c.b16 %v230, %v229
  %v249 = vpack.c.b16 %v232, %v231
  %v250 = vpack.c.b16 %v234, %v233
  %267 = vmatprep.subr.bf16.mxu0 0
  %268 = vmatpush1.bf16.msra.mxu0 %v235
  %269 = vmatprep.subr.bf16.mxu0 0
  %270 = vmatpush1.bf16.msra.mxu0 %v236
  %271 = vmatprep.subr.bf16.mxu0 0
  %272 = vmatpush1.bf16.msra.mxu0 %v237
  %273 = vmatprep.subr.bf16.mxu0 0
  %274 = vmatpush1.bf16.msra.mxu0 %v238
  %275 = vmatprep.subr.bf16.mxu0 0
  %276 = vmatpush1.bf16.msra.mxu0 %v239
  %277 = vmatprep.subr.bf16.mxu0 0
  %278 = vmatpush1.bf16.msra.mxu0 %v240
  %279 = vmatprep.subr.bf16.mxu0 0
  %280 = vmatpush1.bf16.msra.mxu0 %v241
  %281 = vmatprep.subr.bf16.mxu0 0
  %282 = vmatpush1.bf16.msra.mxu0 %v242
  %283 = vmatprep.subr.bf16.mxu0 0
  %284 = vmatpush1.bf16.msra.mxu0 %v243
  %285 = vmatprep.subr.bf16.mxu0 0
  %286 = vmatpush1.bf16.msra.mxu0 %v244
  %287 = vmatprep.subr.bf16.mxu0 0
  %288 = vmatpush1.bf16.msra.mxu0 %v245
  %289 = vmatprep.subr.bf16.mxu0 0
  %290 = vmatpush1.bf16.msra.mxu0 %v246
  %291 = vmatprep.subr.bf16.mxu0 0
  %292 = vmatpush1.bf16.msra.mxu0 %v247
  %293 = vmatprep.subr.bf16.mxu0 0
  %294 = vmatpush1.bf16.msra.mxu0 %v248
  %295 = vmatprep.subr.bf16.mxu0 0
  %296 = vmatpush1.bf16.msra.mxu0 %v249
  %297 = vmatprep.subr.bf16.mxu0 0
  %298 = vmatpush1.bf16.msra.mxu0 %v250
  %299 = vmatprep.mubr.bf16.mxu0 %v138
  %300 = vmatmul.mubr.bf16.gmra.mrb[0].mxu0 %v137
  %v301 = vpop.f32.mrb[0].mxu0
  %v302 = vadd.f32 0.0, %v301
  %v303 = vpop.f32.mrb[0].mxu0
  %v304 = vpop.f32.mrb[0].mxu0
  %v305 = vadd.f32 0.0, %v304
  %v306 = vpop.f32.mrb[0].mxu0
  %307 = vdwg.mxu0
  %v308 = vadd.f32 %v15, %v302
  %v309 = vadd.f32 %v16, %v305
  %310 = vst.msk [vmem:[%s3] sm:$0xff] %vm19, %v308
  %311 = vst.msk [vmem:[%s3 + $0x8] sm:$0xff] %vm19, %v309
  // Predicated region
  $region14: #{gpt_forward.12} parent=0 // pred_check
    _
  $region15: #{gpt_forward.12} parent=0 // pred_check_branch
    %313 = sbr.rel (0) target = $region17
  $region16: #{gpt_forward.12} parent=0 // pred_region
    _
  $region17: #{gpt_forward.12} parent=0 // pred_fallthru
    _
  // Predicated region
  $region18: #{gpt_forward.12} parent=0 // pred_check
    _
  $region19: #{gpt_forward.12} parent=0 // pred_check_branch
    %315 = sbr.rel (0) target = $region21
  $region20: #{gpt_forward.12} parent=0 // pred_region
    _
  $region21: #{gpt_forward.12} parent=0 // pred_fallthru
    _

// kernel: gpt_forward.17
$region0: #{gpt_forward.17}
  #allocation0 [shape = 'u32[]', space=smem, size = 0x4, offset = 0x4, fixed_abs, tag = 'smem constant byte address 0x4 - core index']
  #allocation1 [shape = 'u32[144,128]{1,0:T(1,128)}', space=vmem, size = 0x12000, scoped, tag = 'internal scratch']
  %s0 = inlined_call_operand.vmem [shape: f32[2,64], index: 0, kind: input, shape index: {}]
  %s1 = inlined_call_operand.vmem [shape: bf16[64,96], index: 1, kind: input, shape index: {}]
  %s2 = inlined_call_operand.hbm [shape: f32[2,96], index: 2, kind: output, shape index: {}]
  %s3 = sld [smem:[#allocation0]]
  $region18: #{gpt_forward.17} parent=0
    _
  %s5 = ssub.s32 1, %s3
  %s6 = scalar_select 0, %s5, %s3
  $region1: #{gpt_forward.17} parent=0
    #allocation2 [shape = 'u8[1024]{0}', space=vmem, size = 0x400, scoped, tag = 'output window, operand 0, single buffered']
    #allocation3 [shape = 's32[1]{0}', space=sflag, size = 0x4, scoped, tag = 'scoped memory for gpt_forward.17']
    %7 = vsyncpa [#allocation3], 0
    // Predicated region
    $region2: #{gpt_forward.17} parent=1 // pred_check
      _
    $region3: #{gpt_forward.17} parent=1 // pred_check_branch
      %9 = sbr.rel (0) target = $region5
    $region4: #{gpt_forward.17} parent=1 // pred_region
      _
    $region5: #{gpt_forward.17} parent=1 // pred_fallthru
      _
    // Predicated region
    $region6: #{gpt_forward.17} parent=1 // pred_check
      _
    $region7: #{gpt_forward.17} parent=1 // pred_check_branch
      %11 = sbr.rel (0) target = $region9
    $region8: #{gpt_forward.17} parent=1 // pred_region
      _
    $region9: #{gpt_forward.17} parent=1 // pred_fallthru
      _
    %v13 = vld [vmem:[%s0] sm:$0x3]
    %v14 = vmul.f32 %v13, %v13
    %vm15 = vcmask 517120
    %v16 = vsel %vm15, %v14, 0.0
    %17 = vadd.xlane.f32.xlu0 %v16
    %v18 = vpop.xlane.xlu0 %17
    %v19 = vmul.f32 %v18, 0.015625
    %v20 = vadd.f32 %v19, 1.1920929e-07
    %v21 = vrsqrt.pop %v20
    %v22 = vmul.f32 %v13, %v21
    %v23 = vpack.c.bf16 %v22, %v22
    %v24 = vld [vmem:[%s1] sm:$0xf]
    %v25 = vld [vmem:[%s1 + $0x4] sm:$0xf]
    %v26 = vld [vmem:[%s1 + $0x8] sm:$0xf]
    %v27 = vld [vmem:[%s1 + $0xc] sm:$0xf]
    %v28 = vld [vmem:[%s1 + $0x10] sm:$0xf]
    %v29 = vld [vmem:[%s1 + $0x14] sm:$0xf]
    %v30 = vld [vmem:[%s1 + $0x18] sm:$0xf]
    %v31 = vld [vmem:[%s1 + $0x1c] sm:$0xf]
    %v40 = vunpack.c.l.b16 %v24
    %v41 = vunpack.c.l.b16 %v25
    %v42 = vunpack.c.l.b16 %v26
    %v43 = vunpack.c.l.b16 %v27
    %v44 = vunpack.c.l.b16 %v28
    %v45 = vunpack.c.l.b16 %v29
    %v46 = vunpack.c.l.b16 %v30
    %v47 = vunpack.c.l.b16 %v31
    %v48 = vpack.c.b16 %v41, %v40
    %v49 = vpack.c.b16 %v43, %v42
    %v50 = vpack.c.b16 %v45, %v44
    %v51 = vpack.c.b16 %v47, %v46
    %vm56 = vcmask 523264
    %v58 = vsel %vm56, %v23, 0
    %60 = vmatprep.subr.bf16.mxu0 0
    %61 = vmatpush1.bf16.msra.mxu0 %v48
    %62 = vmatprep.subr.bf16.mxu0 0
    %63 = vmatpush1.bf16.msra.mxu0 %v49
    %64 = vmatprep.subr.bf16.mxu0 0
    %65 = vmatpush1.bf16.msra.mxu0 %v50
    %66 = vmatprep.subr.bf16.mxu0 0
    %67 = vmatpush1.bf16.msra.mxu0 %v51
    %68 = vmatprep.subr.bf16.mxu0 0
    %69 = vmatpush1.bf16.msra.mxu0 0
    %70 = vmatprep.subr.bf16.mxu0 0
    %71 = vmatpush1.bf16.msra.mxu0 0
    %72 = vmatprep.subr.bf16.mxu0 0
    %73 = vmatpush1.bf16.msra.mxu0 0
    %74 = vmatprep.subr.bf16.mxu0 0
    %75 = vmatpush1.bf16.msra.mxu0 0
    %76 = vmatprep.subr.bf16.mxu0 0
    %77 = vmatpush1.bf16.msra.mxu0 0
    %78 = vmatprep.subr.bf16.mxu0 0
    %79 = vmatpush1.bf16.msra.mxu0 0
    %80 = vmatprep.subr.bf16.mxu0 0
    %81 = vmatpush1.bf16.msra.mxu0 0
    %82 = vmatprep.subr.bf16.mxu0 0
    %83 = vmatpush1.bf16.msra.mxu0 0
    %84 = vmatprep.subr.bf16.mxu0 0
    %85 = vmatpush1.bf16.msra.mxu0 0
    %86 = vmatprep.subr.bf16.mxu0 0
    %87 = vmatpush1.bf16.msra.mxu0 0
    %88 = vmatprep.subr.bf16.mxu0 0
    %89 = vmatpush1.bf16.msra.mxu0 0
    %90 = vmatprep.subr.bf16.mxu0 0
    %91 = vmatpush1.bf16.msra.mxu0 0
    %92 = vmatprep.mubr.bf16.mxu0 0
    %93 = vmatmul.mubr.bf16.gmra.mrb[0].mxu0 %v58
    %v94 = vpop.f32.mrb[0].mxu0
    %v95 = vadd.f32 0.0, %v94
    %v96 = vpop.f32.mrb[0].mxu0
    %v97 = vpop.f32.mrb[0].mxu0
    %v98 = vpop.f32.mrb[0].mxu0
    %99 = vdwg.mxu0
    %vm100 = vcmask 779264
    %101 = vst.msk [vmem:[#allocation2] sm:$0x3] %vm100, %v95
    // Predicated region
    $region10: #{gpt_forward.17} parent=1 // pred_check
      _
    $region11: #{gpt_forward.17} parent=1 // pred_check_branch
      %103 = sbr.rel (0) target = $region13
    $region12: #{gpt_forward.17} parent=1 // pred_region
      %s105 = ssub.s32 32, 32
      %106 = vsyncadd [#allocation3], %s105
      %s108 = sshll.u32 [#allocation2], 4
      %s109 = int_to_ptr.vmem [resolvable:$true] %s108
      %111 = dma.vmem_to_hbm [thread:$0]  %s109, 32, %s2, [#allocation3]
    $region13: #{gpt_forward.17} parent=1 // pred_fallthru
      _
    // Predicated region
    $region14: #{gpt_forward.17} parent=1 // pred_check
      _
    $region15: #{gpt_forward.17} parent=1 // pred_check_branch
      %113 = sbr.rel (0) target = $region17
    $region16: #{gpt_forward.17} parent=1 // pred_region
      %114 = dma.done [#allocation3], 32
    $region17: #{gpt_forward.17} parent=1 // pred_fallthru
      _
    %115 = vsyncpa [#allocation3], 1

</llo_original>
